<compile_context>
chip_gen: v6e
topology: v6e:2x2x1
jax: 0.10.0
libtpu: 0.0.40
codegen_flags: <defaults>
</compile_context>

<pallas_src>
import jax
import jax.numpy as jnp
from jax.experimental import pallas as pl
from jax.experimental.pallas import tpu as pltpu

LANE = 128  # pad feature dims (C_mid, D, H_hid, out) to full lane width


def _pad2d(x, rows, cols):
    r, c = x.shape
    return jnp.pad(x, ((0, rows - r), (0, cols - c)))


# ----------------------------- encoder kernel -------------------------------

def encoder_kernel(patches_ref, wc_ref, bc_ref, wf_ref, bf_ref, z_ref):
    """One grid step encodes TN images.

    patches_ref : (TN, HW, K)   bf16  im2col patches
    wc_ref      : (K, LANE)     bf16  conv weight, C_mid zero-padded to 128
    bc_ref      : (1, LANE)     f32
    wf_ref      : (LANE, LANE)  f32   FC weight, (C_mid, D) zero-padded
    bf_ref      : (1, LANE)     f32
    z_ref       : (TN, LANE)    f32   encoded images (D zero-padded)
    """
    tn, hw, k = patches_ref.shape
    p = patches_ref[...].reshape(tn * hw, k)
    # conv-as-matmul for all TN*HW output pixels at once (f32 accumulate)
    conv = jnp.dot(p, wc_ref[...], preferred_element_type=jnp.float32)
    conv = jnp.maximum(conv + bc_ref[...], 0.0)                 # [TN*HW, LANE]
    # global average pool over spatial axis -> [TN, LANE]
    pooled = jnp.mean(conv.reshape(tn, hw, LANE), axis=1)
    # batched FC: one [TN,LANE]@[LANE,LANE] matmul instead of TN M=1 matmuls
    z = jnp.dot(pooled, wf_ref[...], preferred_element_type=jnp.float32)
    z_ref[...] = jnp.maximum(z + bf_ref[...], 0.0)


def encode_images(x_nchw, enc_params):
    """x_nchw: [N, C, H, W] f32 -> [N, LANE] f32 (zero-padded past logical D)."""
    N, C, H, W = x_nchw.shape
    K = 9 * C
    HW = H * W

    # glue: NCHW -> NHWC, pad=1, 3x3 im2col (matches PyTorch conv pad=1).
    # bf16 halves HBM traffic into the kernel; MXU accumulates in f32.
    # TODO(synk): build patches in-kernel from a single padded-image DMA to
    # remove the remaining 9x im2col HBM expansion.
    x = jnp.transpose(x_nchw, (0, 2, 3, 1))
    xp = jnp.pad(x, ((0, 0), (1, 1), (1, 1), (0, 0)))
    pats = [xp[:, ky:ky + H, kx:kx + W, :] for ky in range(3) for kx in range(3)]
    patches = jnp.concatenate(pats, axis=-1).reshape(N, HW, K).astype(jnp.bfloat16)

    # lane-dense, zero-padded weights (exact: padded rows/cols contribute 0)
    wc = _pad2d(enc_params["wc"], K, LANE).astype(jnp.bfloat16)
    bc = _pad2d(enc_params["bc"].reshape(1, -1), 1, LANE)
    wf = _pad2d(enc_params["wf"], LANE, LANE)
    bf = _pad2d(enc_params["bf"].reshape(1, -1), 1, LANE)

    # image tile: amortize per-step overhead; keep >= 2 grid steps when we can
    # (v7x megacore), cap at 32 so f32 intermediates fit scoped VMEM everywhere.
    tn = 32 if N >= 64 else max(1, (N + 1) // 2)
    n_pad = pl.cdiv(N, tn) * tn
    if n_pad != N:
        patches = jnp.pad(patches, ((0, n_pad - N), (0, 0), (0, 0)))

    z = pl.pallas_call(
        encoder_kernel,
        out_shape=jax.ShapeDtypeStruct((n_pad, LANE), jnp.float32),
        grid=(n_pad // tn,),
        in_specs=[
            pl.BlockSpec((tn, HW, K), lambda n: (n, 0, 0)),
            pl.BlockSpec((K, LANE), lambda n: (0, 0)),
            pl.BlockSpec((1, LANE), lambda n: (0, 0)),
            pl.BlockSpec((LANE, LANE), lambda n: (0, 0)),
            pl.BlockSpec((1, LANE), lambda n: (0, 0)),
        ],
        out_specs=pl.BlockSpec((tn, LANE), lambda n: (n, 0)),
        compiler_params=pltpu.CompilerParams(
            dimension_semantics=("parallel",)),
    )(patches, wc, bc, wf, bf)
    return z[:N]


# ----------------------------- set-model kernel ------------------------------

def set_kernel(zx_ref, zy_ref, w1x_ref, w1y_ref, b1_ref, w2_ref, b2_ref, o_ref):
    """Single grid step processes all B set-pairs at once.

    zx_ref : (Bp, NX, LANE)   zy_ref : (Bp, NY, LANE)
    w1x/w1y: (LANE, LANE)     b1: (1, LANE)
    w2     : (LANE, LANE)     b2: (1, LANE)       o_ref: (Bp, LANE)
    """
    mx = jnp.mean(zx_ref[...], axis=1)                      # [Bp, LANE]
    my = jnp.mean(zy_ref[...], axis=1)                      # [Bp, LANE]
    # concat([mx, my]) @ W1  ==  mx @ W1x + my @ W1y
    h = (jnp.dot(mx, w1x_ref[...], preferred_element_type=jnp.float32)
         + jnp.dot(my, w1y_ref[...], preferred_element_type=jnp.float32)
         + b1_ref[...])
    h = jnp.maximum(h, 0.0)                                  # [Bp, LANE]
    o_ref[...] = (jnp.dot(h, w2_ref[...], preferred_element_type=jnp.float32)
                  + b2_ref[...])


def set_model(zx, zy, set_params):
    """zx: [B, NX, LANE], zy: [B, NY, LANE] (feature-padded) -> [B] scores."""
    B, NX, _ = zx.shape
    _, NY, _ = zy.shape

    bp = max(8, pl.cdiv(B, 8) * 8)          # pad batch to full sublanes
    zx = jnp.pad(zx, ((0, bp - B), (0, 0), (0, 0)))
    zy = jnp.pad(zy, ((0, bp - B), (0, 0), (0, 0)))

    w1x = _pad2d(set_params["w1x"], LANE, LANE)
    w1y = _pad2d(set_params["w1y"], LANE, LANE)
    b1 = _pad2d(set_params["b1"].reshape(1, -1), 1, LANE)
    w2 = _pad2d(set_params["w2"], LANE, LANE)     # only column 0 is real
    b2 = _pad2d(set_params["b2"].reshape(1, -1), 1, LANE)

    out = pl.pallas_call(
        set_kernel,
        out_shape=jax.ShapeDtypeStruct((bp, LANE), jnp.float32),
        grid=(1,),
        in_specs=[
            pl.BlockSpec((bp, NX, LANE), lambda i: (0, 0, 0)),
            pl.BlockSpec((bp, NY, LANE), lambda i: (0, 0, 0)),
            pl.BlockSpec((LANE, LANE), lambda i: (0, 0)),
            pl.BlockSpec((LANE, LANE), lambda i: (0, 0)),
            pl.BlockSpec((1, LANE), lambda i: (0, 0)),
            pl.BlockSpec((LANE, LANE), lambda i: (0, 0)),
            pl.BlockSpec((1, LANE), lambda i: (0, 0)),
        ],
        out_specs=pl.BlockSpec((bp, LANE), lambda i: (0, 0)),
        compiler_params=pltpu.CompilerParams(
            dimension_semantics=("arbitrary",)),
    )(zx, zy, w1x, w1y, b1, w2, b2)
    return out[:B, 0]


# --------------------------- composite forward -------------------------------

def multi_set_image_model(X, Y, enc_params, set_params):
    """X: [..., C, H, W], Y: [..., C, H, W] (PyTorch NCHW convention).

    Mirrors MultiSetImageModel.forward:
      ZX = encoder(X.view(-1, C, H, W)).view(*X.shape[:-3], D)
      ZY = encoder(Y.view(-1, C, H, W)).view(*Y.shape[:-3], D)
      return set_model(ZX, ZY)
    """
    img_shape = X.shape[-3:]
    x_flat = X.reshape((-1,) + img_shape)
    y_flat = Y.reshape((-1,) + img_shape)
    n_x = x_flat.shape[0]
    # fuse X and Y encoder passes into one pallas_call (one larger grid)
    z_all = encode_images(jnp.concatenate([x_flat, y_flat], axis=0), enc_params)
    ZX = z_all[:n_x].reshape(X.shape[:-3] + (LANE,))
    ZY = z_all[n_x:].reshape(Y.shape[:-3] + (LANE,))
    return set_model(ZX, ZY, set_params)


# ------------------------------- init + main ---------------------------------

def init_params(key, c_in=4, c_mid=8, d=32, h_hid=32):
    ks = jax.random.split(key, 5)
    k_conv = 9 * c_in
    enc = {
        "wc": jax.random.normal(ks[0], (k_conv, c_mid), jnp.float32) / jnp.sqrt(k_conv),
        "bc": jnp.zeros((c_mid,), jnp.float32),
        "wf": jax.random.normal(ks[1], (c_mid, d), jnp.float32) / jnp.sqrt(c_mid),
        "bf": jnp.zeros((d,), jnp.float32),
    }
    st = {
        "w1x": jax.random.normal(ks[2], (d, h_hid), jnp.float32) / jnp.sqrt(2 * d),
        "w1y": jax.random.normal(ks[3], (d, h_hid), jnp.float32) / jnp.sqrt(2 * d),
        "b1": jnp.zeros((h_hid,), jnp.float32),
        "w2": jax.random.normal(ks[4], (h_hid, 1), jnp.float32) / jnp.sqrt(h_hid),
        "b2": jnp.zeros((1,), jnp.float32),
    }
    return enc, st


if __name__ == "__main__":
    key = jax.random.PRNGKey(0)
    kx, ky, kp = jax.random.split(key, 3)

    B, NX, NY, C, H, W = 2, 3, 5, 4, 16, 16
    X = jax.random.normal(kx, (B, NX, C, H, W), jnp.float32)
    Y = jax.random.normal(ky, (B, NY, C, H, W), jnp.float32)

    enc_params, set_params = init_params(kp, c_in=C, c_mid=8, d=32, h_hid=32)

    out = multi_set_image_model(X, Y, enc_params, set_params)
    out = jax.block_until_ready(out)
    assert out.shape == (B,)
    assert bool(jnp.all(jnp.isfinite(out)))
    print("KERNEL_OK")
</pallas_src>

<mosaic_0001>
module attributes {stable_mosaic.version = 11 : i64} {
  func.func @encoder_kernel(%arg0: i32, %arg1: memref<8x256x36xbf16, #tpu.memory_space<vmem>>, %arg2: memref<36x128xbf16, #tpu.memory_space<vmem>>, %arg3: memref<1x128xf32, #tpu.memory_space<vmem>>, %arg4: memref<128x128xf32, #tpu.memory_space<vmem>>, %arg5: memref<1x128xf32, #tpu.memory_space<vmem>>, %arg6: memref<8x128xf32, #tpu.memory_space<vmem>>) attributes {dimension_semantics = [#tpu.dimension_semantics<parallel>], iteration_bounds = array<i64: 2>, scalar_prefetch = 0 : i64, scratch_operands = 0 : i64, tpu.core_type = #tpu.core_type<tc>, window_params = [{transform_indices = @transform_0, window_bounds = array<i64: 8, 256, 36>}, {pipeline_mode = #tpu.pipeline_mode<synchronous>, transform_indices = @transform_1, window_bounds = array<i64: 36, 128>}, {pipeline_mode = #tpu.pipeline_mode<synchronous>, transform_indices = @transform_2, window_bounds = array<i64: 1, 128>}, {pipeline_mode = #tpu.pipeline_mode<synchronous>, transform_indices = @transform_3, window_bounds = array<i64: 128, 128>}, {pipeline_mode = #tpu.pipeline_mode<synchronous>, transform_indices = @transform_4, window_bounds = array<i64: 1, 128>}, {transform_indices = @transform_5, window_bounds = array<i64: 8, 128>}]} {
    %c0 = arith.constant 0 : index
    %c0_0 = arith.constant 0 : index
    %c0_1 = arith.constant 0 : index
    %0 = vector.load %arg1[%c0, %c0_0, %c0_1] : memref<8x256x36xbf16, #tpu.memory_space<vmem>>, vector<8x256x36xbf16>
    %1 = vector.shape_cast %0 : vector<8x256x36xbf16> to vector<2048x36xbf16>
    %c0_2 = arith.constant 0 : index
    %c0_3 = arith.constant 0 : index
    %2 = vector.load %arg2[%c0_2, %c0_3] : memref<36x128xbf16, #tpu.memory_space<vmem>>, vector<36x128xbf16>
    %cst = arith.constant dense<0.000000e+00> : vector<2048x128xf32>
    %3 = tpu.matmul %1, %2, %cst {dimension_numbers = #tpu.dot_dimension_numbers<[1], [0], [0], [1], [0, 0, 1, 1], [], []>} : vector<2048x36xbf16>, vector<36x128xbf16>, vector<2048x128xf32> -> vector<2048x128xf32>
    %c0_4 = arith.constant 0 : index
    %c0_5 = arith.constant 0 : index
    %4 = vector.load %arg3[%c0_4, %c0_5] : memref<1x128xf32, #tpu.memory_space<vmem>>, vector<1x128xf32>
    %5 = vector.broadcast %4 : vector<1x128xf32> to vector<2048x128xf32>
    %6 = arith.addf %3, %5 : vector<2048x128xf32>
    %cst_6 = arith.constant 0.000000e+00 : f32
    %7 = vector.broadcast %cst_6 : f32 to vector<2048x128xf32>
    %8 = arith.maximumf %6, %7 : vector<2048x128xf32>
    %9 = vector.shape_cast %8 : vector<2048x128xf32> to vector<8x256x128xf32>
    %cst_7 = arith.constant dense<0.000000e+00> : vector<8x128xf32>
    %10 = vector.multi_reduction <add>, %9, %cst_7 [1] : vector<8x256x128xf32> to vector<8x128xf32>
    %cst_8 = arith.constant 2.560000e+02 : f32
    %11 = vector.broadcast %cst_8 : f32 to vector<8x128xf32>
    %12 = arith.divf %10, %11 : vector<8x128xf32>
    %c0_9 = arith.constant 0 : index
    %c0_10 = arith.constant 0 : index
    %13 = vector.load %arg4[%c0_9, %c0_10] : memref<128x128xf32, #tpu.memory_space<vmem>>, vector<128x128xf32>
    %cst_11 = arith.constant dense<0.000000e+00> : vector<8x128xf32>
    %14 = tpu.matmul %12, %13, %cst_11 {dimension_numbers = #tpu.dot_dimension_numbers<[1], [0], [0], [1], [0, 0, 1, 1], [], []>} : vector<8x128xf32>, vector<128x128xf32>, vector<8x128xf32> -> vector<8x128xf32>
    %c0_12 = arith.constant 0 : index
    %c0_13 = arith.constant 0 : index
    %15 = vector.load %arg5[%c0_12, %c0_13] : memref<1x128xf32, #tpu.memory_space<vmem>>, vector<1x128xf32>
    %16 = vector.broadcast %15 : vector<1x128xf32> to vector<8x128xf32>
    %17 = arith.addf %14, %16 : vector<8x128xf32>
    %cst_14 = arith.constant 0.000000e+00 : f32
    %18 = vector.broadcast %cst_14 : f32 to vector<8x128xf32>
    %19 = arith.maximumf %17, %18 : vector<8x128xf32>
    %c0_15 = arith.constant 0 : index
    %c0_16 = arith.constant 0 : index
    %20 = vector.load %arg6[%c0_15, %c0_16] : memref<8x128xf32, #tpu.memory_space<vmem>>, vector<8x128xf32>
    tpu.vector_store %arg6[%c0_15, %c0_16], %19 {strides = array<i32>} : memref<8x128xf32, #tpu.memory_space<vmem>>, vector<8x128xf32>,
    return
  }
  func.func @transform_0(%arg0: i32) -> (i32, i32, i32) {
    %c0_i32 = arith.constant 0 : i32
    %c0_i32_0 = arith.constant 0 : i32
    %c0_i32_1 = arith.constant 0 : i32
    return %arg0, %c0_i32, %c0_i32_0 : i32, i32, i32
  }
  func.func @transform_1(%arg0: i32) -> (i32, i32) {
    %c0_i32 = arith.constant 0 : i32
    %c0_i32_0 = arith.constant 0 : i32
    %c0_i32_1 = arith.constant 0 : i32
    return %c0_i32, %c0_i32_0 : i32, i32
  }
  func.func @transform_2(%arg0: i32) -> (i32, i32) {
    %c0_i32 = arith.constant 0 : i32
    %c0_i32_0 = arith.constant 0 : i32
    %c0_i32_1 = arith.constant 0 : i32
    return %c0_i32, %c0_i32_0 : i32, i32
  }
  func.func @transform_3(%arg0: i32) -> (i32, i32) {
    %c0_i32 = arith.constant 0 : i32
    %c0_i32_0 = arith.constant 0 : i32
    %c0_i32_1 = arith.constant 0 : i32
    return %c0_i32, %c0_i32_0 : i32, i32
  }
  func.func @transform_4(%arg0: i32) -> (i32, i32) {
    %c0_i32 = arith.constant 0 : i32
    %c0_i32_0 = arith.constant 0 : i32
    %c0_i32_1 = arith.constant 0 : i32
    return %c0_i32, %c0_i32_0 : i32, i32
  }
  func.func @transform_5(%arg0: i32) -> (i32, i32) {
    %c0_i32 = arith.constant 0 : i32
    %c0_i32_0 = arith.constant 0 : i32
    return %arg0, %c0_i32 : i32, i32
  }
}

</mosaic_0001>

<llo_original>
// kernel: tpu_custom_call.1
$region0: #{tpu_custom_call.1}
  #allocation0 [shape = 'u32[]', space=smem, size = 0x4, offset = 0x4, fixed_abs, tag = 'smem constant byte address 0x4 - core index']
  #allocation1 [shape = 'u32[144,128]{1,0:T(1,128)}', space=vmem, size = 0x12000, scoped, tag = 'internal scratch']
  %s0 = inlined_call_operand.vmem [shape: bf16[16,256,36], index: 0, kind: input, shape index: {}]
  %s1 = inlined_call_operand.vmem [shape: bf16[36,128], index: 1, kind: input, shape index: {}]
  %s2 = inlined_call_operand.vmem [shape: f32[1,128], index: 2, kind: input, shape index: {}]
  %s3 = inlined_call_operand.vmem [shape: f32[128,128], index: 3, kind: input, shape index: {}]
  %s4 = inlined_call_operand.vmem [shape: f32[1,128], index: 4, kind: input, shape index: {}]
  %s5 = inlined_call_operand.hbm [shape: f32[16,128], index: 5, kind: output, shape index: {}]
  %s6 = sld [smem:[#allocation0]]
  $region53: #{tpu_custom_call.1} parent=0
    _
  %s8 = ssub.s32 1, %s6
  %s9 = scalar_select 0, %s8, %s6
  $region1: #{tpu_custom_call.1} parent=0
    #allocation2 [shape = 'u8[8192]{0}', space=vmem, size = 0x2000, scoped, tag = 'output window, operand 0']
    #allocation3 [shape = 's32[2]{0}', space=sflag, size = 0x8, scoped, tag = 'scoped memory for tpu_custom_call.1']
    %10 = vsyncpa [#allocation3], 0
    %s11 = scalar_lea.sflag [#allocation3], 1
    %12 = vsyncpa %s11, 0
    loop: start=0, step=1, limit=4
    $region2: #{tpu_custom_call.1} parent=1 // loop_pre_header
      _
    $region3: #{tpu_custom_call.1} parent=1 // loop_header
      %s14 = sphi 0, %s18
      %p15 = scmp.ge.s32.totalorder %s14, 4
      %s24 = sphi 0, %s26
      %s27 = sphi 0, %s24
      %s28 = sphi 0, %s27
      %s44 = sphi 0, %s28
      %s48 = sphi 0, %s48
      %s50 = sphi 0, %s48
      %s51 = sphi 0, %s50
      %s65 = sphi 0, %s51
      %s69 = sphi 0, %s69
      %s71 = sphi 0, %s69
      %s72 = sphi 0, %s71
      %s86 = sphi 0, %s72
      %s90 = sphi 0, %s90
      %s92 = sphi 0, %s90
      %s93 = sphi 0, %s92
      %s107 = sphi 0, %s93
      %s111 = sphi 0, %s111
      %s113 = sphi 0, %s111
      %s114 = sphi 0, %s113
      %s128 = sphi 0, %s114
      %s134 = sphi 0, %s136
      %s137 = sphi 0, %s134
      %s138 = sphi 0, %s137
      %s154 = sphi 0, %s138
    $region4: #{tpu_custom_call.1} parent=1 // loop_header_branch
      %17 = sbr.rel (%p15) target = $region8
    $region5: #{tpu_custom_call.1} parent=1 // loop_body
      %s19 = ssub.s32 %s14, 1
      %s20 = ssub.s32 %s14, 2
      %s21 = sadd.s32 %s14, 1
      %s22 = ssub.s32 %s14, %s21
      %p23 = scmp.eq.s32.totalorder %s22, 0
      %s25 = sadd.s32 %s24, 1
      %s26 = scalar_select %p23, %s24, %s25
      %p29 = pneg %p23
      %p30 = scmp.eq.s32.totalorder %s14, 1
      %p31 = por %p29, %p30
      %p32 = scmp.ne.s32.totalorder %s24, %s27
      %p33 = scmp.eq.s32.totalorder %s14, 0
      %p34 = por %p32, %p33
      %p35 = scmp.ne.s32.totalorder %s24, %s27
      %p36 = scmp.eq.s32.totalorder %s19, 1
      %p37 = por %p35, %p36
      %p38 = scmp.ne.s32.totalorder %s27, %s28
      %p39 = scmp.eq.s32.totalorder %s19, 0
      %p40 = por %p38, %p39
      %p41 = scmp.ne.s32.totalorder %s27, %s28
      %p42 = scmp.eq.s32.totalorder %s20, 1
      %p43 = por %p41, %p42
      %p45 = scmp.ne.s32.totalorder %s28, %s44
      %p46 = scmp.eq.s32.totalorder %s20, 0
      %p47 = por %p45, %p46
      %s49 = sadd.s32 %s48, 1
      %p52 = scmp.eq.s32.totalorder %s14, 1
      %p53 = scmp.ne.s32.totalorder %s48, %s50
      %p54 = scmp.eq.s32.totalorder %s14, 0
      %p55 = por %p53, %p54
      %p56 = scmp.ne.s32.totalorder %s48, %s50
      %p57 = scmp.eq.s32.totalorder %s19, 1
      %p58 = por %p56, %p57
      %p59 = scmp.ne.s32.totalorder %s50, %s51
      %p60 = scmp.eq.s32.totalorder %s19, 0
      %p61 = por %p59, %p60
      %p62 = scmp.ne.s32.totalorder %s50, %s51
      %p63 = scmp.eq.s32.totalorder %s20, 1
      %p64 = por %p62, %p63
      %p66 = scmp.ne.s32.totalorder %s51, %s65
      %p67 = scmp.eq.s32.totalorder %s20, 0
      %p68 = por %p66, %p67
      %s70 = sadd.s32 %s69, 1
      %p73 = scmp.eq.s32.totalorder %s14, 1
      %p74 = scmp.ne.s32.totalorder %s69, %s71
      %p75 = scmp.eq.s32.totalorder %s14, 0
      %p76 = por %p74, %p75
      %p77 = scmp.ne.s32.totalorder %s69, %s71
      %p78 = scmp.eq.s32.totalorder %s19, 1
      %p79 = por %p77, %p78
      %p80 = scmp.ne.s32.totalorder %s71, %s72
      %p81 = scmp.eq.s32.totalorder %s19, 0
      %p82 = por %p80, %p81
      %p83 = scmp.ne.s32.totalorder %s71, %s72
      %p84 = scmp.eq.s32.totalorder %s20, 1
      %p85 = por %p83, %p84
      %p87 = scmp.ne.s32.totalorder %s72, %s86
      %p88 = scmp.eq.s32.totalorder %s20, 0
      %p89 = por %p87, %p88
      %s91 = sadd.s32 %s90, 1
      %p94 = scmp.eq.s32.totalorder %s14, 1
      %p95 = scmp.ne.s32.totalorder %s90, %s92
      %p96 = scmp.eq.s32.totalorder %s14, 0
      %p97 = por %p95, %p96
      %p98 = scmp.ne.s32.totalorder %s90, %s92
      %p99 = scmp.eq.s32.totalorder %s19, 1
      %p100 = por %p98, %p99
      %p101 = scmp.ne.s32.totalorder %s92, %s93
      %p102 = scmp.eq.s32.totalorder %s19, 0
      %p103 = por %p101, %p102
      %p104 = scmp.ne.s32.totalorder %s92, %s93
      %p105 = scmp.eq.s32.totalorder %s20, 1
      %p106 = por %p104, %p105
      %p108 = scmp.ne.s32.totalorder %s93, %s107
      %p109 = scmp.eq.s32.totalorder %s20, 0
      %p110 = por %p108, %p109
      %s112 = sadd.s32 %s111, 1
      %p115 = scmp.eq.s32.totalorder %s14, 1
      %p116 = scmp.ne.s32.totalorder %s111, %s113
      %p117 = scmp.eq.s32.totalorder %s14, 0
      %p118 = por %p116, %p117
      %p119 = scmp.ne.s32.totalorder %s111, %s113
      %p120 = scmp.eq.s32.totalorder %s19, 1
      %p121 = por %p119, %p120
      %p122 = scmp.ne.s32.totalorder %s113, %s114
      %p123 = scmp.eq.s32.totalorder %s19, 0
      %p124 = por %p122, %p123
      %p125 = scmp.ne.s32.totalorder %s113, %s114
      %p126 = scmp.eq.s32.totalorder %s20, 1
      %p127 = por %p125, %p126
      %p129 = scmp.ne.s32.totalorder %s114, %s128
      %p130 = scmp.eq.s32.totalorder %s20, 0
      %p131 = por %p129, %p130
      %s132 = ssub.s32 %s14, %s21
      %p133 = scmp.eq.s32.totalorder %s132, 0
      %s135 = sadd.s32 %s134, 1
      %s136 = scalar_select %p133, %s134, %s135
      %p139 = pneg %p133
      %p140 = scmp.eq.s32.totalorder %s14, 1
      %p141 = por %p139, %p140
      %p142 = scmp.ne.s32.totalorder %s134, %s137
      %p143 = scmp.eq.s32.totalorder %s14, 0
      %p144 = por %p142, %p143
      %p145 = scmp.ne.s32.totalorder %s134, %s137
      %p146 = scmp.eq.s32.totalorder %s19, 1
      %p147 = por %p145, %p146
      %p148 = scmp.ne.s32.totalorder %s137, %s138
      %p149 = scmp.eq.s32.totalorder %s19, 0
      %p150 = por %p148, %p149
      %p151 = scmp.ne.s32.totalorder %s137, %s138
      %p152 = scmp.eq.s32.totalorder %s20, 1
      %p153 = por %p151, %p152
      %p155 = scmp.ne.s32.totalorder %s138, %s154
      %p156 = scmp.eq.s32.totalorder %s20, 0
      %p157 = por %p155, %p156
      %p158 = scmp.le.s32.totalorder 1, %s14
      %p159 = scmp.lt.s32.totalorder %s14, 3
      %p160 = pnand %p158, %p159
      %p161 = pneg %p160
      // Predicated region
      $region9: #{tpu_custom_call.1} parent=5 // pred_check
        _
      $region10: #{tpu_custom_call.1} parent=5 // pred_check_branch
        %163 = sbr.rel (%p160) target = $region12
      $region11: #{tpu_custom_call.1} parent=5 // pred_region
        %s164 = ssub.s32 %s14, 1
        // Predicated region
        $region13: #{tpu_custom_call.1} parent=11 // pred_check
          %p165 = pneg %p61
        $region14: #{tpu_custom_call.1} parent=11 // pred_check_branch
          %167 = sbr.rel (%p165) target = $region16
        $region15: #{tpu_custom_call.1} parent=11 // pred_region
          _
        $region16: #{tpu_custom_call.1} parent=11 // pred_fallthru
          _
        // Predicated region
        $region17: #{tpu_custom_call.1} parent=11 // pred_check
          %p168 = pneg %p82
        $region18: #{tpu_custom_call.1} parent=11 // pred_check_branch
          %170 = sbr.rel (%p168) target = $region20
        $region19: #{tpu_custom_call.1} parent=11 // pred_region
          _
        $region20: #{tpu_custom_call.1} parent=11 // pred_fallthru
          _
        // Predicated region
        $region21: #{tpu_custom_call.1} parent=11 // pred_check
          %p171 = pneg %p103
        $region22: #{tpu_custom_call.1} parent=11 // pred_check_branch
          %173 = sbr.rel (%p171) target = $region24
        $region23: #{tpu_custom_call.1} parent=11 // pred_region
          _
        $region24: #{tpu_custom_call.1} parent=11 // pred_fallthru
          _
        // Predicated region
        $region25: #{tpu_custom_call.1} parent=11 // pred_check
          %p174 = pneg %p124
        $region26: #{tpu_custom_call.1} parent=11 // pred_check_branch
          %176 = sbr.rel (%p174) target = $region28
        $region27: #{tpu_custom_call.1} parent=11 // pred_region
          _
        $region28: #{tpu_custom_call.1} parent=11 // pred_fallthru
          _
      $region12: #{tpu_custom_call.1} parent=5 // pred_fallthru
        _
      %p177 = scmp.lt.s32.totalorder %s14, 2
      // Predicated region
      $region29: #{tpu_custom_call.1} parent=5 // pred_check
        %p178 = pneg %p177
      $region30: #{tpu_custom_call.1} parent=5 // pred_check_branch
        %180 = sbr.rel (%p178) target = $region32
      $region31: #{tpu_custom_call.1} parent=5 // pred_region
        // Predicated region
        $region33: #{tpu_custom_call.1} parent=31 // pred_check
          %p181 = pneg %p34
        $region34: #{tpu_custom_call.1} parent=31 // pred_check_branch
          %183 = sbr.rel (%p181) target = $region36
        $region35: #{tpu_custom_call.1} parent=31 // pred_region
          %s184 = smul.u32 8, %s14
          %p185 = scmp.lt.s32.totalorder %s184, 15
          %s186 = scalar_select %p185, %s184, 15
          %s187 = smul.addr %s186, 32
          %s188 = smul.addr %s187, 4
          %s189 = scalar_lea.vmem %s0, %s188
          %s190 = smul.u32 8, %s14
        $region36: #{tpu_custom_call.1} parent=31 // pred_fallthru
          _
      $region32: #{tpu_custom_call.1} parent=5 // pred_fallthru
        _
      %p191 = scmp.le.s32.totalorder 1, %s14
      %p192 = scmp.lt.s32.totalorder %s14, 3
      %p193 = pnand %p191, %p192
      %p194 = pneg %p193
      // Predicated region
      $region37: #{tpu_custom_call.1} parent=5 // pred_check
        _
      $region38: #{tpu_custom_call.1} parent=5 // pred_check_branch
        %196 = sbr.rel (%p193) target = $region40
      $region39: #{tpu_custom_call.1} parent=5 // pred_region
        %s197 = ssub.s32 %s14, 1
        %s198 = smul.u32 8, %s19
        %p199 = scmp.lt.s32.totalorder %s198, 15
        %s200 = scalar_select %p199, %s198, 15
        %s201 = smul.addr %s200, 32
        %s202 = smul.addr %s201, 4
        %s203 = scalar_lea.vmem %s0, %s202
        %p204 = pneg %p40
        %p205 = pneg %p37
        %p206 = pneg %p61
        %p207 = pneg %p58
        %p208 = pneg %p82
        %p209 = pneg %p79
        %p210 = pneg %p103
        %p211 = pneg %p100
        %p212 = pneg %p124
        %p213 = pneg %p121
        %p214 = pneg %p150
        %p215 = pneg %p147
        %s216 = sand.u32 %s137, 1
        %s217 = scalar_lea.sflag [#allocation3], %s216
        %s218 = sand.u32 %s137, 1
        %s219 = smul.addr %s218, 8
        %s220 = scalar_lea.vmem [#allocation2], %s219
        %s221 = smul.u32 8, %s19
        %p222 = scmp.lt.s32.totalorder %s221, 15
        %s223 = scalar_select %p222, %s221, 15
        %s224 = smul.addr %s223, 32
        %s225 = smul.addr %s224, 4
        %s226 = scalar_lea.vmem %s0, %s225
        %s227 = smul.u32 8, %s19
        %v229 = vld [vmem:[%s226] sm:$0xf]
        %v230 = vld [vmem:[%s226 + $0x4] sm:$0xf]
        %v231 = vld [vmem:[%s226 + $0x8] sm:$0xf]
        %v232 = vld [vmem:[%s226 + $0xc] sm:$0xf]
        %v233 = vld [vmem:[%s226 + $0x10] sm:$0xf]
        %v234 = vld [vmem:[%s226 + $0x14] sm:$0xf]
        %v235 = vld [vmem:[%s226 + $0x18] sm:$0xf]
        %v236 = vld [vmem:[%s226 + $0x1c] sm:$0xf]
        %v237 = vld [vmem:[%s226 + $0x20] sm:$0xf]
        %v238 = vld [vmem:[%s226 + $0x24] sm:$0xf]
        %v239 = vld [vmem:[%s226 + $0x28] sm:$0xf]
        %v240 = vld [vmem:[%s226 + $0x2c] sm:$0xf]
        %v241 = vld [vmem:[%s226 + $0x30] sm:$0xf]
        %v242 = vld [vmem:[%s226 + $0x34] sm:$0xf]
        %v243 = vld [vmem:[%s226 + $0x38] sm:$0xf]
        %v244 = vld [vmem:[%s226 + $0x3c] sm:$0xf]
        %v245 = vld [vmem:[%s226 + $0x40] sm:$0xf]
        %v246 = vld [vmem:[%s226 + $0x44] sm:$0xf]
        %v247 = vld [vmem:[%s226 + $0x48] sm:$0xf]
        %v248 = vld [vmem:[%s226 + $0x4c] sm:$0xf]
        %v249 = vld [vmem:[%s226 + $0x50] sm:$0xf]
        %v250 = vld [vmem:[%s226 + $0x54] sm:$0xf]
        %v251 = vld [vmem:[%s226 + $0x58] sm:$0xf]
        %v252 = vld [vmem:[%s226 + $0x5c] sm:$0xf]
        %v253 = vld [vmem:[%s226 + $0x60] sm:$0xf]
        %v254 = vld [vmem:[%s226 + $0x64] sm:$0xf]
        %v255 = vld [vmem:[%s226 + $0x68] sm:$0xf]
        %v256 = vld [vmem:[%s226 + $0x6c] sm:$0xf]
        %v257 = vld [vmem:[%s226 + $0x70] sm:$0xf]
        %v258 = vld [vmem:[%s226 + $0x74] sm:$0xf]
        %v259 = vld [vmem:[%s226 + $0x78] sm:$0xf]
        %v260 = vld [vmem:[%s226 + $0x7c] sm:$0xf]
        %v261 = vld [vmem:[%s226 + $0x80] sm:$0xf]
        %v262 = vld [vmem:[%s226 + $0x84] sm:$0xf]
        %v263 = vld [vmem:[%s226 + $0x88] sm:$0xf]
        %v264 = vld [vmem:[%s226 + $0x8c] sm:$0xf]
        %v265 = vld [vmem:[%s226 + $0x90] sm:$0xf]
        %v266 = vld [vmem:[%s226 + $0x94] sm:$0xf]
        %v267 = vld [vmem:[%s226 + $0x98] sm:$0xf]
        %v268 = vld [vmem:[%s226 + $0x9c] sm:$0xf]
        %v269 = vld [vmem:[%s226 + $0xa0] sm:$0xf]
        %v270 = vld [vmem:[%s226 + $0xa4] sm:$0xf]
        %v271 = vld [vmem:[%s226 + $0xa8] sm:$0xf]
        %v272 = vld [vmem:[%s226 + $0xac] sm:$0xf]
        %v273 = vld [vmem:[%s226 + $0xb0] sm:$0xf]
        %v274 = vld [vmem:[%s226 + $0xb4] sm:$0xf]
        %v275 = vld [vmem:[%s226 + $0xb8] sm:$0xf]
        %v276 = vld [vmem:[%s226 + $0xbc] sm:$0xf]
        %v277 = vld [vmem:[%s226 + $0xc0] sm:$0xf]
        %v278 = vld [vmem:[%s226 + $0xc4] sm:$0xf]
        %v279 = vld [vmem:[%s226 + $0xc8] sm:$0xf]
        %v280 = vld [vmem:[%s226 + $0xcc] sm:$0xf]
        %v281 = vld [vmem:[%s226 + $0xd0] sm:$0xf]
        %v282 = vld [vmem:[%s226 + $0xd4] sm:$0xf]
        %v283 = vld [vmem:[%s226 + $0xd8] sm:$0xf]
        %v284 = vld [vmem:[%s226 + $0xdc] sm:$0xf]
        %v285 = vld [vmem:[%s226 + $0xe0] sm:$0xf]
        %v286 = vld [vmem:[%s226 + $0xe4] sm:$0xf]
        %v287 = vld [vmem:[%s226 + $0xe8] sm:$0xf]
        %v288 = vld [vmem:[%s226 + $0xec] sm:$0xf]
        %v289 = vld [vmem:[%s226 + $0xf0] sm:$0xf]
        %v290 = vld [vmem:[%s226 + $0xf4] sm:$0xf]
        %v291 = vld [vmem:[%s226 + $0xf8] sm:$0xf]
        %v292 = vld [vmem:[%s226 + $0xfc] sm:$0xf]
        %v293 = vld [vmem:[%s226 + $0x100] sm:$0xf]
        %v294 = vld [vmem:[%s226 + $0x104] sm:$0xf]
        %v295 = vld [vmem:[%s226 + $0x108] sm:$0xf]
        %v296 = vld [vmem:[%s226 + $0x10c] sm:$0xf]
        %v297 = vld [vmem:[%s226 + $0x110] sm:$0xf]
        %v298 = vld [vmem:[%s226 + $0x114] sm:$0xf]
        %v299 = vld [vmem:[%s226 + $0x118] sm:$0xf]
        %v300 = vld [vmem:[%s226 + $0x11c] sm:$0xf]
        %v301 = vld [vmem:[%s226 + $0x120] sm:$0xf]
        %v302 = vld [vmem:[%s226 + $0x124] sm:$0xf]
        %v303 = vld [vmem:[%s226 + $0x128] sm:$0xf]
        %v304 = vld [vmem:[%s226 + $0x12c] sm:$0xf]
        %v305 = vld [vmem:[%s226 + $0x130] sm:$0xf]
        %v306 = vld [vmem:[%s226 + $0x134] sm:$0xf]
        %v307 = vld [vmem:[%s226 + $0x138] sm:$0xf]
        %v308 = vld [vmem:[%s226 + $0x13c] sm:$0xf]
        %v309 = vld [vmem:[%s226 + $0x140] sm:$0xf]
        %v310 = vld [vmem:[%s226 + $0x144] sm:$0xf]
        %v311 = vld [vmem:[%s226 + $0x148] sm:$0xf]
        %v312 = vld [vmem:[%s226 + $0x14c] sm:$0xf]
        %v313 = vld [vmem:[%s226 + $0x150] sm:$0xf]
        %v314 = vld [vmem:[%s226 + $0x154] sm:$0xf]
        %v315 = vld [vmem:[%s226 + $0x158] sm:$0xf]
        %v316 = vld [vmem:[%s226 + $0x15c] sm:$0xf]
        %v317 = vld [vmem:[%s226 + $0x160] sm:$0xf]
        %v318 = vld [vmem:[%s226 + $0x164] sm:$0xf]
        %v319 = vld [vmem:[%s226 + $0x168] sm:$0xf]
        %v320 = vld [vmem:[%s226 + $0x16c] sm:$0xf]
        %v321 = vld [vmem:[%s226 + $0x170] sm:$0xf]
        %v322 = vld [vmem:[%s226 + $0x174] sm:$0xf]
        %v323 = vld [vmem:[%s226 + $0x178] sm:$0xf]
        %v324 = vld [vmem:[%s226 + $0x17c] sm:$0xf]
        %v325 = vld [vmem:[%s226 + $0x180] sm:$0xf]
        %v326 = vld [vmem:[%s226 + $0x184] sm:$0xf]
        %v327 = vld [vmem:[%s226 + $0x188] sm:$0xf]
        %v328 = vld [vmem:[%s226 + $0x18c] sm:$0xf]
        %v329 = vld [vmem:[%s226 + $0x190] sm:$0xf]
        %v330 = vld [vmem:[%s226 + $0x194] sm:$0xf]
        %v331 = vld [vmem:[%s226 + $0x198] sm:$0xf]
        %v332 = vld [vmem:[%s226 + $0x19c] sm:$0xf]
        %v333 = vld [vmem:[%s226 + $0x1a0] sm:$0xf]
        %v334 = vld [vmem:[%s226 + $0x1a4] sm:$0xf]
        %v335 = vld [vmem:[%s226 + $0x1a8] sm:$0xf]
        %v336 = vld [vmem:[%s226 + $0x1ac] sm:$0xf]
        %v337 = vld [vmem:[%s226 + $0x1b0] sm:$0xf]
        %v338 = vld [vmem:[%s226 + $0x1b4] sm:$0xf]
        %v339 = vld [vmem:[%s226 + $0x1b8] sm:$0xf]
        %v340 = vld [vmem:[%s226 + $0x1bc] sm:$0xf]
        %v341 = vld [vmem:[%s226 + $0x1c0] sm:$0xf]
        %v342 = vld [vmem:[%s226 + $0x1c4] sm:$0xf]
        %v343 = vld [vmem:[%s226 + $0x1c8] sm:$0xf]
        %v344 = vld [vmem:[%s226 + $0x1cc] sm:$0xf]
        %v345 = vld [vmem:[%s226 + $0x1d0] sm:$0xf]
        %v346 = vld [vmem:[%s226 + $0x1d4] sm:$0xf]
        %v347 = vld [vmem:[%s226 + $0x1d8] sm:$0xf]
        %v348 = vld [vmem:[%s226 + $0x1dc] sm:$0xf]
        %v349 = vld [vmem:[%s226 + $0x1e0] sm:$0xf]
        %v350 = vld [vmem:[%s226 + $0x1e4] sm:$0xf]
        %v351 = vld [vmem:[%s226 + $0x1e8] sm:$0xf]
        %v352 = vld [vmem:[%s226 + $0x1ec] sm:$0xf]
        %v353 = vld [vmem:[%s226 + $0x1f0] sm:$0xf]
        %v354 = vld [vmem:[%s226 + $0x1f4] sm:$0xf]
        %v355 = vld [vmem:[%s226 + $0x1f8] sm:$0xf]
        %v356 = vld [vmem:[%s226 + $0x1fc] sm:$0xf]
        %v357 = vld [vmem:[%s226 + $0x200] sm:$0xf]
        %v358 = vld [vmem:[%s226 + $0x204] sm:$0xf]
        %v359 = vld [vmem:[%s226 + $0x208] sm:$0xf]
        %v360 = vld [vmem:[%s226 + $0x20c] sm:$0xf]
        %v361 = vld [vmem:[%s226 + $0x210] sm:$0xf]
        %v362 = vld [vmem:[%s226 + $0x214] sm:$0xf]
        %v363 = vld [vmem:[%s226 + $0x218] sm:$0xf]
        %v364 = vld [vmem:[%s226 + $0x21c] sm:$0xf]
        %v365 = vld [vmem:[%s226 + $0x220] sm:$0xf]
        %v366 = vld [vmem:[%s226 + $0x224] sm:$0xf]
        %v367 = vld [vmem:[%s226 + $0x228] sm:$0xf]
        %v368 = vld [vmem:[%s226 + $0x22c] sm:$0xf]
        %v369 = vld [vmem:[%s226 + $0x230] sm:$0xf]
        %v370 = vld [vmem:[%s226 + $0x234] sm:$0xf]
        %v371 = vld [vmem:[%s226 + $0x238] sm:$0xf]
        %v372 = vld [vmem:[%s226 + $0x23c] sm:$0xf]
        %v373 = vld [vmem:[%s226 + $0x240] sm:$0xf]
        %v374 = vld [vmem:[%s226 + $0x244] sm:$0xf]
        %v375 = vld [vmem:[%s226 + $0x248] sm:$0xf]
        %v376 = vld [vmem:[%s226 + $0x24c] sm:$0xf]
        %v377 = vld [vmem:[%s226 + $0x250] sm:$0xf]
        %v378 = vld [vmem:[%s226 + $0x254] sm:$0xf]
        %v379 = vld [vmem:[%s226 + $0x258] sm:$0xf]
        %v380 = vld [vmem:[%s226 + $0x25c] sm:$0xf]
        %v381 = vld [vmem:[%s226 + $0x260] sm:$0xf]
        %v382 = vld [vmem:[%s226 + $0x264] sm:$0xf]
        %v383 = vld [vmem:[%s226 + $0x268] sm:$0xf]
        %v384 = vld [vmem:[%s226 + $0x26c] sm:$0xf]
        %v385 = vld [vmem:[%s226 + $0x270] sm:$0xf]
        %v386 = vld [vmem:[%s226 + $0x274] sm:$0xf]
        %v387 = vld [vmem:[%s226 + $0x278] sm:$0xf]
        %v388 = vld [vmem:[%s226 + $0x27c] sm:$0xf]
        %v389 = vld [vmem:[%s226 + $0x280] sm:$0xf]
        %v390 = vld [vmem:[%s226 + $0x284] sm:$0xf]
        %v391 = vld [vmem:[%s226 + $0x288] sm:$0xf]
        %v392 = vld [vmem:[%s226 + $0x28c] sm:$0xf]
        %v393 = vld [vmem:[%s226 + $0x290] sm:$0xf]
        %v394 = vld [vmem:[%s226 + $0x294] sm:$0xf]
        %v395 = vld [vmem:[%s226 + $0x298] sm:$0xf]
        %v396 = vld [vmem:[%s226 + $0x29c] sm:$0xf]
        %v397 = vld [vmem:[%s226 + $0x2a0] sm:$0xf]
        %v398 = vld [vmem:[%s226 + $0x2a4] sm:$0xf]
        %v399 = vld [vmem:[%s226 + $0x2a8] sm:$0xf]
        %v400 = vld [vmem:[%s226 + $0x2ac] sm:$0xf]
        %v401 = vld [vmem:[%s226 + $0x2b0] sm:$0xf]
        %v402 = vld [vmem:[%s226 + $0x2b4] sm:$0xf]
        %v403 = vld [vmem:[%s226 + $0x2b8] sm:$0xf]
        %v404 = vld [vmem:[%s226 + $0x2bc] sm:$0xf]
        %v405 = vld [vmem:[%s226 + $0x2c0] sm:$0xf]
        %v406 = vld [vmem:[%s226 + $0x2c4] sm:$0xf]
        %v407 = vld [vmem:[%s226 + $0x2c8] sm:$0xf]
        %v408 = vld [vmem:[%s226 + $0x2cc] sm:$0xf]
        %v409 = vld [vmem:[%s226 + $0x2d0] sm:$0xf]
        %v410 = vld [vmem:[%s226 + $0x2d4] sm:$0xf]
        %v411 = vld [vmem:[%s226 + $0x2d8] sm:$0xf]
        %v412 = vld [vmem:[%s226 + $0x2dc] sm:$0xf]
        %v413 = vld [vmem:[%s226 + $0x2e0] sm:$0xf]
        %v414 = vld [vmem:[%s226 + $0x2e4] sm:$0xf]
        %v415 = vld [vmem:[%s226 + $0x2e8] sm:$0xf]
        %v416 = vld [vmem:[%s226 + $0x2ec] sm:$0xf]
        %v417 = vld [vmem:[%s226 + $0x2f0] sm:$0xf]
        %v418 = vld [vmem:[%s226 + $0x2f4] sm:$0xf]
        %v419 = vld [vmem:[%s226 + $0x2f8] sm:$0xf]
        %v420 = vld [vmem:[%s226 + $0x2fc] sm:$0xf]
        %v421 = vld [vmem:[%s226 + $0x300] sm:$0xf]
        %v422 = vld [vmem:[%s226 + $0x304] sm:$0xf]
        %v423 = vld [vmem:[%s226 + $0x308] sm:$0xf]
        %v424 = vld [vmem:[%s226 + $0x30c] sm:$0xf]
        %v425 = vld [vmem:[%s226 + $0x310] sm:$0xf]
        %v426 = vld [vmem:[%s226 + $0x314] sm:$0xf]
        %v427 = vld [vmem:[%s226 + $0x318] sm:$0xf]
        %v428 = vld [vmem:[%s226 + $0x31c] sm:$0xf]
        %v429 = vld [vmem:[%s226 + $0x320] sm:$0xf]
        %v430 = vld [vmem:[%s226 + $0x324] sm:$0xf]
        %v431 = vld [vmem:[%s226 + $0x328] sm:$0xf]
        %v432 = vld [vmem:[%s226 + $0x32c] sm:$0xf]
        %v433 = vld [vmem:[%s226 + $0x330] sm:$0xf]
        %v434 = vld [vmem:[%s226 + $0x334] sm:$0xf]
        %v435 = vld [vmem:[%s226 + $0x338] sm:$0xf]
        %v436 = vld [vmem:[%s226 + $0x33c] sm:$0xf]
        %v437 = vld [vmem:[%s226 + $0x340] sm:$0xf]
        %v438 = vld [vmem:[%s226 + $0x344] sm:$0xf]
        %v439 = vld [vmem:[%s226 + $0x348] sm:$0xf]
        %v440 = vld [vmem:[%s226 + $0x34c] sm:$0xf]
        %v441 = vld [vmem:[%s226 + $0x350] sm:$0xf]
        %v442 = vld [vmem:[%s226 + $0x354] sm:$0xf]
        %v443 = vld [vmem:[%s226 + $0x358] sm:$0xf]
        %v444 = vld [vmem:[%s226 + $0x35c] sm:$0xf]
        %v445 = vld [vmem:[%s226 + $0x360] sm:$0xf]
        %v446 = vld [vmem:[%s226 + $0x364] sm:$0xf]
        %v447 = vld [vmem:[%s226 + $0x368] sm:$0xf]
        %v448 = vld [vmem:[%s226 + $0x36c] sm:$0xf]
        %v449 = vld [vmem:[%s226 + $0x370] sm:$0xf]
        %v450 = vld [vmem:[%s226 + $0x374] sm:$0xf]
        %v451 = vld [vmem:[%s226 + $0x378] sm:$0xf]
        %v452 = vld [vmem:[%s226 + $0x37c] sm:$0xf]
        %v453 = vld [vmem:[%s226 + $0x380] sm:$0xf]
        %v454 = vld [vmem:[%s226 + $0x384] sm:$0xf]
        %v455 = vld [vmem:[%s226 + $0x388] sm:$0xf]
        %v456 = vld [vmem:[%s226 + $0x38c] sm:$0xf]
        %v457 = vld [vmem:[%s226 + $0x390] sm:$0xf]
        %v458 = vld [vmem:[%s226 + $0x394] sm:$0xf]
        %v459 = vld [vmem:[%s226 + $0x398] sm:$0xf]
        %v460 = vld [vmem:[%s226 + $0x39c] sm:$0xf]
        %v461 = vld [vmem:[%s226 + $0x3a0] sm:$0xf]
        %v462 = vld [vmem:[%s226 + $0x3a4] sm:$0xf]
        %v463 = vld [vmem:[%s226 + $0x3a8] sm:$0xf]
        %v464 = vld [vmem:[%s226 + $0x3ac] sm:$0xf]
        %v465 = vld [vmem:[%s226 + $0x3b0] sm:$0xf]
        %v466 = vld [vmem:[%s226 + $0x3b4] sm:$0xf]
        %v467 = vld [vmem:[%s226 + $0x3b8] sm:$0xf]
        %v468 = vld [vmem:[%s226 + $0x3bc] sm:$0xf]
        %v469 = vld [vmem:[%s226 + $0x3c0] sm:$0xf]
        %v470 = vld [vmem:[%s226 + $0x3c4] sm:$0xf]
        %v471 = vld [vmem:[%s226 + $0x3c8] sm:$0xf]
        %v472 = vld [vmem:[%s226 + $0x3cc] sm:$0xf]
        %v473 = vld [vmem:[%s226 + $0x3d0] sm:$0xf]
        %v474 = vld [vmem:[%s226 + $0x3d4] sm:$0xf]
        %v475 = vld [vmem:[%s226 + $0x3d8] sm:$0xf]
        %v476 = vld [vmem:[%s226 + $0x3dc] sm:$0xf]
        %v477 = vld [vmem:[%s226 + $0x3e0] sm:$0xf]
        %v478 = vld [vmem:[%s226 + $0x3e4] sm:$0xf]
        %v479 = vld [vmem:[%s226 + $0x3e8] sm:$0xf]
        %v480 = vld [vmem:[%s226 + $0x3ec] sm:$0xf]
        %v481 = vld [vmem:[%s226 + $0x3f0] sm:$0xf]
        %v482 = vld [vmem:[%s226 + $0x3f4] sm:$0xf]
        %v483 = vld [vmem:[%s226 + $0x3f8] sm:$0xf]
        %v484 = vld [vmem:[%s226 + $0x3fc] sm:$0xf]
        %v485 = vld [vmem:[%s1] sm:$0xf]
        %v486 = vld [vmem:[%s1 + $0x4] sm:$0xf]
        %v487 = vld [vmem:[%s1 + $0x8] sm:$0xf]
        %v488 = vld [vmem:[%s1 + $0xc] sm:$0xf]
        %v489 = vld [vmem:[%s1 + $0x10] sm:$0x3]
        %v490 = vld [vmem:[%s2] sm:$0x1]
        %v492 = vlaneseq
        %v493 = vshrl.u32 %v492, 7
        %v494 = vsub.s32 0, %v493
        %v495 = vrot.slane %v490, %v494
        %v753 = vunpack.c.l.b16 %v229
        %v754 = vunpack.c.l.b16 %v230
        %v755 = vunpack.c.l.b16 %v231
        %v756 = vunpack.c.l.b16 %v232
        %v757 = vunpack.c.l.b16 %v233
        %v758 = vunpack.c.l.b16 %v234
        %v759 = vunpack.c.l.b16 %v235
        %v760 = vunpack.c.l.b16 %v236
        %v761 = vunpack.c.l.b16 %v237
        %v762 = vunpack.c.l.b16 %v238
        %v763 = vunpack.c.l.b16 %v239
        %v764 = vunpack.c.l.b16 %v240
        %v765 = vunpack.c.l.b16 %v241
        %v766 = vunpack.c.l.b16 %v242
        %v767 = vunpack.c.l.b16 %v243
        %v768 = vunpack.c.l.b16 %v244
        %v769 = vunpack.c.l.b16 %v245
        %v770 = vunpack.c.l.b16 %v246
        %v771 = vunpack.c.l.b16 %v247
        %v772 = vunpack.c.l.b16 %v248
        %v773 = vunpack.c.l.b16 %v249
        %v774 = vunpack.c.l.b16 %v250
        %v775 = vunpack.c.l.b16 %v251
        %v776 = vunpack.c.l.b16 %v252
        %v777 = vunpack.c.l.b16 %v253
        %v778 = vunpack.c.l.b16 %v254
        %v779 = vunpack.c.l.b16 %v255
        %v780 = vunpack.c.l.b16 %v256
        %v781 = vunpack.c.l.b16 %v257
        %v782 = vunpack.c.l.b16 %v258
        %v783 = vunpack.c.l.b16 %v259
        %v784 = vunpack.c.l.b16 %v260
        %v785 = vunpack.c.l.b16 %v261
        %v786 = vunpack.c.l.b16 %v262
        %v787 = vunpack.c.l.b16 %v263
        %v788 = vunpack.c.l.b16 %v264
        %v789 = vunpack.c.l.b16 %v265
        %v790 = vunpack.c.l.b16 %v266
        %v791 = vunpack.c.l.b16 %v267
        %v792 = vunpack.c.l.b16 %v268
        %v793 = vunpack.c.l.b16 %v269
        %v794 = vunpack.c.l.b16 %v270
        %v795 = vunpack.c.l.b16 %v271
        %v796 = vunpack.c.l.b16 %v272
        %v797 = vunpack.c.l.b16 %v273
        %v798 = vunpack.c.l.b16 %v274
        %v799 = vunpack.c.l.b16 %v275
        %v800 = vunpack.c.l.b16 %v276
        %v801 = vunpack.c.l.b16 %v277
        %v802 = vunpack.c.l.b16 %v278
        %v803 = vunpack.c.l.b16 %v279
        %v804 = vunpack.c.l.b16 %v280
        %v805 = vunpack.c.l.b16 %v281
        %v806 = vunpack.c.l.b16 %v282
        %v807 = vunpack.c.l.b16 %v283
        %v808 = vunpack.c.l.b16 %v284
        %v809 = vunpack.c.l.b16 %v285
        %v810 = vunpack.c.l.b16 %v286
        %v811 = vunpack.c.l.b16 %v287
        %v812 = vunpack.c.l.b16 %v288
        %v813 = vunpack.c.l.b16 %v289
        %v814 = vunpack.c.l.b16 %v290
        %v815 = vunpack.c.l.b16 %v291
        %v816 = vunpack.c.l.b16 %v292
        %v817 = vunpack.c.l.b16 %v293
        %v818 = vunpack.c.l.b16 %v294
        %v819 = vunpack.c.l.b16 %v295
        %v820 = vunpack.c.l.b16 %v296
        %v821 = vunpack.c.l.b16 %v297
        %v822 = vunpack.c.l.b16 %v298
        %v823 = vunpack.c.l.b16 %v299
        %v824 = vunpack.c.l.b16 %v300
        %v825 = vunpack.c.l.b16 %v301
        %v826 = vunpack.c.l.b16 %v302
        %v827 = vunpack.c.l.b16 %v303
        %v828 = vunpack.c.l.b16 %v304
        %v829 = vunpack.c.l.b16 %v305
        %v830 = vunpack.c.l.b16 %v306
        %v831 = vunpack.c.l.b16 %v307
        %v832 = vunpack.c.l.b16 %v308
        %v833 = vunpack.c.l.b16 %v309
        %v834 = vunpack.c.l.b16 %v310
        %v835 = vunpack.c.l.b16 %v311
        %v836 = vunpack.c.l.b16 %v312
        %v837 = vunpack.c.l.b16 %v313
        %v838 = vunpack.c.l.b16 %v314
        %v839 = vunpack.c.l.b16 %v315
        %v840 = vunpack.c.l.b16 %v316
        %v841 = vunpack.c.l.b16 %v317
        %v842 = vunpack.c.l.b16 %v318
        %v843 = vunpack.c.l.b16 %v319
        %v844 = vunpack.c.l.b16 %v320
        %v845 = vunpack.c.l.b16 %v321
        %v846 = vunpack.c.l.b16 %v322
        %v847 = vunpack.c.l.b16 %v323
        %v848 = vunpack.c.l.b16 %v324
        %v849 = vunpack.c.l.b16 %v325
        %v850 = vunpack.c.l.b16 %v326
        %v851 = vunpack.c.l.b16 %v327
        %v852 = vunpack.c.l.b16 %v328
        %v853 = vunpack.c.l.b16 %v329
        %v854 = vunpack.c.l.b16 %v330
        %v855 = vunpack.c.l.b16 %v331
        %v856 = vunpack.c.l.b16 %v332
        %v857 = vunpack.c.l.b16 %v333
        %v858 = vunpack.c.l.b16 %v334
        %v859 = vunpack.c.l.b16 %v335
        %v860 = vunpack.c.l.b16 %v336
        %v861 = vunpack.c.l.b16 %v337
        %v862 = vunpack.c.l.b16 %v338
        %v863 = vunpack.c.l.b16 %v339
        %v864 = vunpack.c.l.b16 %v340
        %v865 = vunpack.c.l.b16 %v341
        %v866 = vunpack.c.l.b16 %v342
        %v867 = vunpack.c.l.b16 %v343
        %v868 = vunpack.c.l.b16 %v344
        %v869 = vunpack.c.l.b16 %v345
        %v870 = vunpack.c.l.b16 %v346
        %v871 = vunpack.c.l.b16 %v347
        %v872 = vunpack.c.l.b16 %v348
        %v873 = vunpack.c.l.b16 %v349
        %v874 = vunpack.c.l.b16 %v350
        %v875 = vunpack.c.l.b16 %v351
        %v876 = vunpack.c.l.b16 %v352
        %v877 = vunpack.c.l.b16 %v353
        %v878 = vunpack.c.l.b16 %v354
        %v879 = vunpack.c.l.b16 %v355
        %v880 = vunpack.c.l.b16 %v356
        %v881 = vunpack.c.l.b16 %v357
        %v882 = vunpack.c.l.b16 %v358
        %v883 = vunpack.c.l.b16 %v359
        %v884 = vunpack.c.l.b16 %v360
        %v885 = vunpack.c.l.b16 %v361
        %v886 = vunpack.c.l.b16 %v362
        %v887 = vunpack.c.l.b16 %v363
        %v888 = vunpack.c.l.b16 %v364
        %v889 = vunpack.c.l.b16 %v365
        %v890 = vunpack.c.l.b16 %v366
        %v891 = vunpack.c.l.b16 %v367
        %v892 = vunpack.c.l.b16 %v368
        %v893 = vunpack.c.l.b16 %v369
        %v894 = vunpack.c.l.b16 %v370
        %v895 = vunpack.c.l.b16 %v371
        %v896 = vunpack.c.l.b16 %v372
        %v897 = vunpack.c.l.b16 %v373
        %v898 = vunpack.c.l.b16 %v374
        %v899 = vunpack.c.l.b16 %v375
        %v900 = vunpack.c.l.b16 %v376
        %v901 = vunpack.c.l.b16 %v377
        %v902 = vunpack.c.l.b16 %v378
        %v903 = vunpack.c.l.b16 %v379
        %v904 = vunpack.c.l.b16 %v380
        %v905 = vunpack.c.l.b16 %v381
        %v906 = vunpack.c.l.b16 %v382
        %v907 = vunpack.c.l.b16 %v383
        %v908 = vunpack.c.l.b16 %v384
        %v909 = vunpack.c.l.b16 %v385
        %v910 = vunpack.c.l.b16 %v386
        %v911 = vunpack.c.l.b16 %v387
        %v912 = vunpack.c.l.b16 %v388
        %v913 = vunpack.c.l.b16 %v389
        %v914 = vunpack.c.l.b16 %v390
        %v915 = vunpack.c.l.b16 %v391
        %v916 = vunpack.c.l.b16 %v392
        %v917 = vunpack.c.l.b16 %v393
        %v918 = vunpack.c.l.b16 %v394
        %v919 = vunpack.c.l.b16 %v395
        %v920 = vunpack.c.l.b16 %v396
        %v921 = vunpack.c.l.b16 %v397
        %v922 = vunpack.c.l.b16 %v398
        %v923 = vunpack.c.l.b16 %v399
        %v924 = vunpack.c.l.b16 %v400
        %v925 = vunpack.c.l.b16 %v401
        %v926 = vunpack.c.l.b16 %v402
        %v927 = vunpack.c.l.b16 %v403
        %v928 = vunpack.c.l.b16 %v404
        %v929 = vunpack.c.l.b16 %v405
        %v930 = vunpack.c.l.b16 %v406
        %v931 = vunpack.c.l.b16 %v407
        %v932 = vunpack.c.l.b16 %v408
        %v933 = vunpack.c.l.b16 %v409
        %v934 = vunpack.c.l.b16 %v410
        %v935 = vunpack.c.l.b16 %v411
        %v936 = vunpack.c.l.b16 %v412
        %v937 = vunpack.c.l.b16 %v413
        %v938 = vunpack.c.l.b16 %v414
        %v939 = vunpack.c.l.b16 %v415
        %v940 = vunpack.c.l.b16 %v416
        %v941 = vunpack.c.l.b16 %v417
        %v942 = vunpack.c.l.b16 %v418
        %v943 = vunpack.c.l.b16 %v419
        %v944 = vunpack.c.l.b16 %v420
        %v945 = vunpack.c.l.b16 %v421
        %v946 = vunpack.c.l.b16 %v422
        %v947 = vunpack.c.l.b16 %v423
        %v948 = vunpack.c.l.b16 %v424
        %v949 = vunpack.c.l.b16 %v425
        %v950 = vunpack.c.l.b16 %v426
        %v951 = vunpack.c.l.b16 %v427
        %v952 = vunpack.c.l.b16 %v428
        %v953 = vunpack.c.l.b16 %v429
        %v954 = vunpack.c.l.b16 %v430
        %v955 = vunpack.c.l.b16 %v431
        %v956 = vunpack.c.l.b16 %v432
        %v957 = vunpack.c.l.b16 %v433
        %v958 = vunpack.c.l.b16 %v434
        %v959 = vunpack.c.l.b16 %v435
        %v960 = vunpack.c.l.b16 %v436
        %v961 = vunpack.c.l.b16 %v437
        %v962 = vunpack.c.l.b16 %v438
        %v963 = vunpack.c.l.b16 %v439
        %v964 = vunpack.c.l.b16 %v440
        %v965 = vunpack.c.l.b16 %v441
        %v966 = vunpack.c.l.b16 %v442
        %v967 = vunpack.c.l.b16 %v443
        %v968 = vunpack.c.l.b16 %v444
        %v969 = vunpack.c.l.b16 %v445
        %v970 = vunpack.c.l.b16 %v446
        %v971 = vunpack.c.l.b16 %v447
        %v972 = vunpack.c.l.b16 %v448
        %v973 = vunpack.c.l.b16 %v449
        %v974 = vunpack.c.l.b16 %v450
        %v975 = vunpack.c.l.b16 %v451
        %v976 = vunpack.c.l.b16 %v452
        %v977 = vunpack.c.l.b16 %v453
        %v978 = vunpack.c.l.b16 %v454
        %v979 = vunpack.c.l.b16 %v455
        %v980 = vunpack.c.l.b16 %v456
        %v981 = vunpack.c.l.b16 %v457
        %v982 = vunpack.c.l.b16 %v458
        %v983 = vunpack.c.l.b16 %v459
        %v984 = vunpack.c.l.b16 %v460
        %v985 = vunpack.c.l.b16 %v461
        %v986 = vunpack.c.l.b16 %v462
        %v987 = vunpack.c.l.b16 %v463
        %v988 = vunpack.c.l.b16 %v464
        %v989 = vunpack.c.l.b16 %v465
        %v990 = vunpack.c.l.b16 %v466
        %v991 = vunpack.c.l.b16 %v467
        %v992 = vunpack.c.l.b16 %v468
        %v993 = vunpack.c.l.b16 %v469
        %v994 = vunpack.c.l.b16 %v470
        %v995 = vunpack.c.l.b16 %v471
        %v996 = vunpack.c.l.b16 %v472
        %v997 = vunpack.c.l.b16 %v473
        %v998 = vunpack.c.l.b16 %v474
        %v999 = vunpack.c.l.b16 %v475
        %v1000 = vunpack.c.l.b16 %v476
        %v1001 = vunpack.c.l.b16 %v477
        %v1002 = vunpack.c.l.b16 %v478
        %v1003 = vunpack.c.l.b16 %v479
        %v1004 = vunpack.c.l.b16 %v480
        %v1005 = vunpack.c.l.b16 %v481
        %v1006 = vunpack.c.l.b16 %v482
        %v1007 = vunpack.c.l.b16 %v483
        %v1008 = vunpack.c.l.b16 %v484
        %v1009 = vpack.c.b16 %v754, %v753
        %v1010 = vpack.c.b16 %v756, %v755
        %v1011 = vpack.c.b16 %v758, %v757
        %v1012 = vpack.c.b16 %v760, %v759
        %v1013 = vpack.c.b16 %v762, %v761
        %v1014 = vpack.c.b16 %v764, %v763
        %v1015 = vpack.c.b16 %v766, %v765
        %v1016 = vpack.c.b16 %v768, %v767
        %v1017 = vpack.c.b16 %v770, %v769
        %v1018 = vpack.c.b16 %v772, %v771
        %v1019 = vpack.c.b16 %v774, %v773
        %v1020 = vpack.c.b16 %v776, %v775
        %v1021 = vpack.c.b16 %v778, %v777
        %v1022 = vpack.c.b16 %v780, %v779
        %v1023 = vpack.c.b16 %v782, %v781
        %v1024 = vpack.c.b16 %v784, %v783
        %v1025 = vpack.c.b16 %v786, %v785
        %v1026 = vpack.c.b16 %v788, %v787
        %v1027 = vpack.c.b16 %v790, %v789
        %v1028 = vpack.c.b16 %v792, %v791
        %v1029 = vpack.c.b16 %v794, %v793
        %v1030 = vpack.c.b16 %v796, %v795
        %v1031 = vpack.c.b16 %v798, %v797
        %v1032 = vpack.c.b16 %v800, %v799
        %v1033 = vpack.c.b16 %v802, %v801
        %v1034 = vpack.c.b16 %v804, %v803
        %v1035 = vpack.c.b16 %v806, %v805
        %v1036 = vpack.c.b16 %v808, %v807
        %v1037 = vpack.c.b16 %v810, %v809
        %v1038 = vpack.c.b16 %v812, %v811
        %v1039 = vpack.c.b16 %v814, %v813
        %v1040 = vpack.c.b16 %v816, %v815
        %v1041 = vpack.c.b16 %v818, %v817
        %v1042 = vpack.c.b16 %v820, %v819
        %v1043 = vpack.c.b16 %v822, %v821
        %v1044 = vpack.c.b16 %v824, %v823
        %v1045 = vpack.c.b16 %v826, %v825
        %v1046 = vpack.c.b16 %v828, %v827
        %v1047 = vpack.c.b16 %v830, %v829
        %v1048 = vpack.c.b16 %v832, %v831
        %v1049 = vpack.c.b16 %v834, %v833
        %v1050 = vpack.c.b16 %v836, %v835
        %v1051 = vpack.c.b16 %v838, %v837
        %v1052 = vpack.c.b16 %v840, %v839
        %v1053 = vpack.c.b16 %v842, %v841
        %v1054 = vpack.c.b16 %v844, %v843
        %v1055 = vpack.c.b16 %v846, %v845
        %v1056 = vpack.c.b16 %v848, %v847
        %v1057 = vpack.c.b16 %v850, %v849
        %v1058 = vpack.c.b16 %v852, %v851
        %v1059 = vpack.c.b16 %v854, %v853
        %v1060 = vpack.c.b16 %v856, %v855
        %v1061 = vpack.c.b16 %v858, %v857
        %v1062 = vpack.c.b16 %v860, %v859
        %v1063 = vpack.c.b16 %v862, %v861
        %v1064 = vpack.c.b16 %v864, %v863
        %v1065 = vpack.c.b16 %v866, %v865
        %v1066 = vpack.c.b16 %v868, %v867
        %v1067 = vpack.c.b16 %v870, %v869
        %v1068 = vpack.c.b16 %v872, %v871
        %v1069 = vpack.c.b16 %v874, %v873
        %v1070 = vpack.c.b16 %v876, %v875
        %v1071 = vpack.c.b16 %v878, %v877
        %v1072 = vpack.c.b16 %v880, %v879
        %v1073 = vpack.c.b16 %v882, %v881
        %v1074 = vpack.c.b16 %v884, %v883
        %v1075 = vpack.c.b16 %v886, %v885
        %v1076 = vpack.c.b16 %v888, %v887
        %v1077 = vpack.c.b16 %v890, %v889
        %v1078 = vpack.c.b16 %v892, %v891
        %v1079 = vpack.c.b16 %v894, %v893
        %v1080 = vpack.c.b16 %v896, %v895
        %v1081 = vpack.c.b16 %v898, %v897
        %v1082 = vpack.c.b16 %v900, %v899
        %v1083 = vpack.c.b16 %v902, %v901
        %v1084 = vpack.c.b16 %v904, %v903
        %v1085 = vpack.c.b16 %v906, %v905
        %v1086 = vpack.c.b16 %v908, %v907
        %v1087 = vpack.c.b16 %v910, %v909
        %v1088 = vpack.c.b16 %v912, %v911
        %v1089 = vpack.c.b16 %v914, %v913
        %v1090 = vpack.c.b16 %v916, %v915
        %v1091 = vpack.c.b16 %v918, %v917
        %v1092 = vpack.c.b16 %v920, %v919
        %v1093 = vpack.c.b16 %v922, %v921
        %v1094 = vpack.c.b16 %v924, %v923
        %v1095 = vpack.c.b16 %v926, %v925
        %v1096 = vpack.c.b16 %v928, %v927
        %v1097 = vpack.c.b16 %v930, %v929
        %v1098 = vpack.c.b16 %v932, %v931
        %v1099 = vpack.c.b16 %v934, %v933
        %v1100 = vpack.c.b16 %v936, %v935
        %v1101 = vpack.c.b16 %v938, %v937
        %v1102 = vpack.c.b16 %v940, %v939
        %v1103 = vpack.c.b16 %v942, %v941
        %v1104 = vpack.c.b16 %v944, %v943
        %v1105 = vpack.c.b16 %v946, %v945
        %v1106 = vpack.c.b16 %v948, %v947
        %v1107 = vpack.c.b16 %v950, %v949
        %v1108 = vpack.c.b16 %v952, %v951
        %v1109 = vpack.c.b16 %v954, %v953
        %v1110 = vpack.c.b16 %v956, %v955
        %v1111 = vpack.c.b16 %v958, %v957
        %v1112 = vpack.c.b16 %v960, %v959
        %v1113 = vpack.c.b16 %v962, %v961
        %v1114 = vpack.c.b16 %v964, %v963
        %v1115 = vpack.c.b16 %v966, %v965
        %v1116 = vpack.c.b16 %v968, %v967
        %v1117 = vpack.c.b16 %v970, %v969
        %v1118 = vpack.c.b16 %v972, %v971
        %v1119 = vpack.c.b16 %v974, %v973
        %v1120 = vpack.c.b16 %v976, %v975
        %v1121 = vpack.c.b16 %v978, %v977
        %v1122 = vpack.c.b16 %v980, %v979
        %v1123 = vpack.c.b16 %v982, %v981
        %v1124 = vpack.c.b16 %v984, %v983
        %v1125 = vpack.c.b16 %v986, %v985
        %v1126 = vpack.c.b16 %v988, %v987
        %v1127 = vpack.c.b16 %v990, %v989
        %v1128 = vpack.c.b16 %v992, %v991
        %v1129 = vpack.c.b16 %v994, %v993
        %v1130 = vpack.c.b16 %v996, %v995
        %v1131 = vpack.c.b16 %v998, %v997
        %v1132 = vpack.c.b16 %v1000, %v999
        %v1133 = vpack.c.b16 %v1002, %v1001
        %v1134 = vpack.c.b16 %v1004, %v1003
        %v1135 = vpack.c.b16 %v1006, %v1005
        %v1136 = vpack.c.b16 %v1008, %v1007
        %v1142 = vunpack.c.l.b16 %v485
        %v1143 = vunpack.c.l.b16 %v486
        %v1144 = vunpack.c.l.b16 %v487
        %v1145 = vunpack.c.l.b16 %v488
        %v1146 = vunpack.c.l.b16 %v489
        %v1147 = vpack.c.b16 %v1143, %v1142
        %v1148 = vpack.c.b16 %v1145, %v1144
        %v1149 = vpack.c.b16 %v1146, %v1146
        %vm1152 = vcmask 293888
        %v1154 = vsel %vm1152, %v1009, 0
        %v1157 = vsel %vm1152, %v1010, 0
        %v1160 = vsel %vm1152, %v1011, 0
        %v1163 = vsel %vm1152, %v1012, 0
        %v1166 = vsel %vm1152, %v1013, 0
        %v1169 = vsel %vm1152, %v1014, 0
        %v1172 = vsel %vm1152, %v1015, 0
        %v1175 = vsel %vm1152, %v1016, 0
        %v1178 = vsel %vm1152, %v1017, 0
        %v1181 = vsel %vm1152, %v1018, 0
        %v1184 = vsel %vm1152, %v1019, 0
        %v1187 = vsel %vm1152, %v1020, 0
        %v1190 = vsel %vm1152, %v1021, 0
        %v1193 = vsel %vm1152, %v1022, 0
        %v1196 = vsel %vm1152, %v1023, 0
        %v1199 = vsel %vm1152, %v1024, 0
        %v1202 = vsel %vm1152, %v1025, 0
        %v1205 = vsel %vm1152, %v1026, 0
        %v1208 = vsel %vm1152, %v1027, 0
        %v1211 = vsel %vm1152, %v1028, 0
        %v1214 = vsel %vm1152, %v1029, 0
        %v1217 = vsel %vm1152, %v1030, 0
        %v1220 = vsel %vm1152, %v1031, 0
        %v1223 = vsel %vm1152, %v1032, 0
        %v1226 = vsel %vm1152, %v1033, 0
        %v1229 = vsel %vm1152, %v1034, 0
        %v1232 = vsel %vm1152, %v1035, 0
        %v1235 = vsel %vm1152, %v1036, 0
        %v1238 = vsel %vm1152, %v1037, 0
        %v1241 = vsel %vm1152, %v1038, 0
        %v1244 = vsel %vm1152, %v1039, 0
        %v1247 = vsel %vm1152, %v1040, 0
        %v1250 = vsel %vm1152, %v1041, 0
        %v1253 = vsel %vm1152, %v1042, 0
        %v1256 = vsel %vm1152, %v1043, 0
        %v1259 = vsel %vm1152, %v1044, 0
        %v1262 = vsel %vm1152, %v1045, 0
        %v1265 = vsel %vm1152, %v1046, 0
        %v1268 = vsel %vm1152, %v1047, 0
        %v1271 = vsel %vm1152, %v1048, 0
        %v1274 = vsel %vm1152, %v1049, 0
        %v1277 = vsel %vm1152, %v1050, 0
        %v1280 = vsel %vm1152, %v1051, 0
        %v1283 = vsel %vm1152, %v1052, 0
        %v1286 = vsel %vm1152, %v1053, 0
        %v1289 = vsel %vm1152, %v1054, 0
        %v1292 = vsel %vm1152, %v1055, 0
        %v1295 = vsel %vm1152, %v1056, 0
        %v1298 = vsel %vm1152, %v1057, 0
        %v1301 = vsel %vm1152, %v1058, 0
        %v1304 = vsel %vm1152, %v1059, 0
        %v1307 = vsel %vm1152, %v1060, 0
        %v1310 = vsel %vm1152, %v1061, 0
        %v1313 = vsel %vm1152, %v1062, 0
        %v1316 = vsel %vm1152, %v1063, 0
        %v1319 = vsel %vm1152, %v1064, 0
        %v1322 = vsel %vm1152, %v1065, 0
        %v1325 = vsel %vm1152, %v1066, 0
        %v1328 = vsel %vm1152, %v1067, 0
        %v1331 = vsel %vm1152, %v1068, 0
        %v1334 = vsel %vm1152, %v1069, 0
        %v1337 = vsel %vm1152, %v1070, 0
        %v1340 = vsel %vm1152, %v1071, 0
        %v1343 = vsel %vm1152, %v1072, 0
        %v1346 = vsel %vm1152, %v1073, 0
        %v1349 = vsel %vm1152, %v1074, 0
        %v1352 = vsel %vm1152, %v1075, 0
        %v1355 = vsel %vm1152, %v1076, 0
        %v1358 = vsel %vm1152, %v1077, 0
        %v1361 = vsel %vm1152, %v1078, 0
        %v1364 = vsel %vm1152, %v1079, 0
        %v1367 = vsel %vm1152, %v1080, 0
        %v1370 = vsel %vm1152, %v1081, 0
        %v1373 = vsel %vm1152, %v1082, 0
        %v1376 = vsel %vm1152, %v1083, 0
        %v1379 = vsel %vm1152, %v1084, 0
        %v1382 = vsel %vm1152, %v1085, 0
        %v1385 = vsel %vm1152, %v1086, 0
        %v1388 = vsel %vm1152, %v1087, 0
        %v1391 = vsel %vm1152, %v1088, 0
        %v1394 = vsel %vm1152, %v1089, 0
        %v1397 = vsel %vm1152, %v1090, 0
        %v1400 = vsel %vm1152, %v1091, 0
        %v1403 = vsel %vm1152, %v1092, 0
        %v1406 = vsel %vm1152, %v1093, 0
        %v1409 = vsel %vm1152, %v1094, 0
        %v1412 = vsel %vm1152, %v1095, 0
        %v1415 = vsel %vm1152, %v1096, 0
        %v1418 = vsel %vm1152, %v1097, 0
        %v1421 = vsel %vm1152, %v1098, 0
        %v1424 = vsel %vm1152, %v1099, 0
        %v1427 = vsel %vm1152, %v1100, 0
        %v1430 = vsel %vm1152, %v1101, 0
        %v1433 = vsel %vm1152, %v1102, 0
        %v1436 = vsel %vm1152, %v1103, 0
        %v1439 = vsel %vm1152, %v1104, 0
        %v1442 = vsel %vm1152, %v1105, 0
        %v1445 = vsel %vm1152, %v1106, 0
        %v1448 = vsel %vm1152, %v1107, 0
        %v1451 = vsel %vm1152, %v1108, 0
        %v1454 = vsel %vm1152, %v1109, 0
        %v1457 = vsel %vm1152, %v1110, 0
        %v1460 = vsel %vm1152, %v1111, 0
        %v1463 = vsel %vm1152, %v1112, 0
        %v1466 = vsel %vm1152, %v1113, 0
        %v1469 = vsel %vm1152, %v1114, 0
        %v1472 = vsel %vm1152, %v1115, 0
        %v1475 = vsel %vm1152, %v1116, 0
        %v1478 = vsel %vm1152, %v1117, 0
        %v1481 = vsel %vm1152, %v1118, 0
        %v1484 = vsel %vm1152, %v1119, 0
        %v1487 = vsel %vm1152, %v1120, 0
        %v1490 = vsel %vm1152, %v1121, 0
        %v1493 = vsel %vm1152, %v1122, 0
        %v1496 = vsel %vm1152, %v1123, 0
        %v1499 = vsel %vm1152, %v1124, 0
        %v1502 = vsel %vm1152, %v1125, 0
        %v1505 = vsel %vm1152, %v1126, 0
        %v1508 = vsel %vm1152, %v1127, 0
        %v1511 = vsel %vm1152, %v1128, 0
        %v1514 = vsel %vm1152, %v1129, 0
        %v1517 = vsel %vm1152, %v1130, 0
        %v1520 = vsel %vm1152, %v1131, 0
        %v1523 = vsel %vm1152, %v1132, 0
        %v1526 = vsel %vm1152, %v1133, 0
        %v1529 = vsel %vm1152, %v1134, 0
        %v1532 = vsel %vm1152, %v1135, 0
        %v1535 = vsel %vm1152, %v1136, 0
        %vm1537 = vcmask 1041408
        %v1539 = vsel %vm1537, %v1149, 0
        %1541 = vmatprep.subr.bf16.mxu0 0
        %1542 = vmatpush1.bf16.msra.mxu0 0
        %1543 = vmatprep.subr.bf16.mxu0 0
        %1544 = vmatpush1.bf16.msra.mxu0 0
        %1545 = vmatprep.subr.bf16.mxu0 0
        %1546 = vmatpush1.bf16.msra.mxu0 0
        %1547 = vmatprep.subr.bf16.mxu0 0
        %1548 = vmatpush1.bf16.msra.mxu0 0
        %1549 = vmatprep.subr.bf16.mxu0 0
        %1550 = vmatpush1.bf16.msra.mxu0 0
        %1551 = vmatprep.subr.bf16.mxu0 0
        %1552 = vmatpush1.bf16.msra.mxu0 %v1539
        %1553 = vmatprep.subr.bf16.mxu0 0
        %1554 = vmatpush1.bf16.msra.mxu0 %v1148
        %1555 = vmatprep.subr.bf16.mxu0 0
        %1556 = vmatpush1.bf16.msra.mxu0 %v1147
        %1557 = vmatprep.subr.bf16.mxu0 0
        %1558 = vmatpush2.bf16.msra.mxu0 0
        %1559 = vmatprep.subr.bf16.mxu0 0
        %1560 = vmatpush2.bf16.msra.mxu0 0
        %1561 = vmatprep.subr.bf16.mxu0 0
        %1562 = vmatpush2.bf16.msra.mxu0 0
        %1563 = vmatprep.subr.bf16.mxu0 0
        %1564 = vmatpush2.bf16.msra.mxu0 0
        %1565 = vmatprep.subr.bf16.mxu0 0
        %1566 = vmatpush2.bf16.msra.mxu0 0
        %1567 = vmatprep.subr.bf16.mxu0 0
        %1568 = vmatpush2.bf16.msra.mxu0 0
        %1569 = vmatprep.subr.bf16.mxu0 0
        %1570 = vmatpush2.bf16.msra.mxu0 0
        %1571 = vmatprep.subr.bf16.mxu0 0
        %1572 = vmatpush2.bf16.msra.mxu0 0
        %1573 = vmatprep.mubr.bf16.mxu0 0
        %1574 = vmatmul.mubr.bf16.gmra.mxu0 %v1154
        %v1575 = vpop.f32.mrf.mxu0
        %v1576 = vadd.f32 %v495, %v1575
        %v1577 = vpop.f32.mrf.mxu0
        %v1578 = vpop.f32.mrf.mxu0
        %v1579 = vadd.f32 %v495, %v1578
        %v1580 = vpop.f32.mrf.mxu0
        %1581 = vmatprep.mubr.bf16.mxu0 0
        %1582 = vmatmul.mubr.bf16.gmra.mxu0 %v1157
        %v1583 = vpop.f32.mrf.mxu0
        %v1584 = vadd.f32 %v495, %v1583
        %v1585 = vpop.f32.mrf.mxu0
        %v1586 = vpop.f32.mrf.mxu0
        %v1587 = vadd.f32 %v495, %v1586
        %v1588 = vpop.f32.mrf.mxu0
        %1589 = vmatprep.mubr.bf16.mxu0 0
        %1590 = vmatmul.mubr.bf16.gmra.mxu0 %v1160
        %v1591 = vpop.f32.mrf.mxu0
        %v1592 = vadd.f32 %v495, %v1591
        %v1593 = vpop.f32.mrf.mxu0
        %v1594 = vpop.f32.mrf.mxu0
        %v1595 = vadd.f32 %v495, %v1594
        %v1596 = vpop.f32.mrf.mxu0
        %1597 = vmatprep.mubr.bf16.mxu0 0
        %1598 = vmatmul.mubr.bf16.gmra.mxu0 %v1163
        %v1599 = vpop.f32.mrf.mxu0
        %v1600 = vadd.f32 %v495, %v1599
        %v1601 = vpop.f32.mrf.mxu0
        %v1602 = vpop.f32.mrf.mxu0
        %v1603 = vadd.f32 %v495, %v1602
        %v1604 = vpop.f32.mrf.mxu0
        %1605 = vmatprep.mubr.bf16.mxu0 0
        %1606 = vmatmul.mubr.bf16.gmra.mxu0 %v1166
        %v1607 = vpop.f32.mrf.mxu0
        %v1608 = vadd.f32 %v495, %v1607
        %v1609 = vpop.f32.mrf.mxu0
        %v1610 = vpop.f32.mrf.mxu0
        %v1611 = vadd.f32 %v495, %v1610
        %v1612 = vpop.f32.mrf.mxu0
        %1613 = vmatprep.mubr.bf16.mxu0 0
        %1614 = vmatmul.mubr.bf16.gmra.mxu0 %v1169
        %v1615 = vpop.f32.mrf.mxu0
        %v1616 = vadd.f32 %v495, %v1615
        %v1617 = vpop.f32.mrf.mxu0
        %v1618 = vpop.f32.mrf.mxu0
        %v1619 = vadd.f32 %v495, %v1618
        %v1620 = vpop.f32.mrf.mxu0
        %1621 = vmatprep.mubr.bf16.mxu0 0
        %1622 = vmatmul.mubr.bf16.gmra.mxu0 %v1172
        %v1623 = vpop.f32.mrf.mxu0
        %v1624 = vadd.f32 %v495, %v1623
        %v1625 = vpop.f32.mrf.mxu0
        %v1626 = vpop.f32.mrf.mxu0
        %v1627 = vadd.f32 %v495, %v1626
        %v1628 = vpop.f32.mrf.mxu0
        %1629 = vmatprep.mubr.bf16.mxu0 0
        %1630 = vmatmul.mubr.bf16.gmra.mxu0 %v1175
        %v1631 = vpop.f32.mrf.mxu0
        %v1632 = vadd.f32 %v495, %v1631
        %v1633 = vpop.f32.mrf.mxu0
        %v1634 = vpop.f32.mrf.mxu0
        %v1635 = vadd.f32 %v495, %v1634
        %v1636 = vpop.f32.mrf.mxu0
        %1637 = vmatprep.mubr.bf16.mxu0 0
        %1638 = vmatmul.mubr.bf16.gmra.mxu0 %v1178
        %v1639 = vpop.f32.mrf.mxu0
        %v1640 = vadd.f32 %v495, %v1639
        %v1641 = vpop.f32.mrf.mxu0
        %v1642 = vpop.f32.mrf.mxu0
        %v1643 = vadd.f32 %v495, %v1642
        %v1644 = vpop.f32.mrf.mxu0
        %1645 = vmatprep.mubr.bf16.mxu0 0
        %1646 = vmatmul.mubr.bf16.gmra.mxu0 %v1181
        %v1647 = vpop.f32.mrf.mxu0
        %v1648 = vadd.f32 %v495, %v1647
        %v1649 = vpop.f32.mrf.mxu0
        %v1650 = vpop.f32.mrf.mxu0
        %v1651 = vadd.f32 %v495, %v1650
        %v1652 = vpop.f32.mrf.mxu0
        %1653 = vmatprep.mubr.bf16.mxu0 0
        %1654 = vmatmul.mubr.bf16.gmra.mxu0 %v1184
        %v1655 = vpop.f32.mrf.mxu0
        %v1656 = vadd.f32 %v495, %v1655
        %v1657 = vpop.f32.mrf.mxu0
        %v1658 = vpop.f32.mrf.mxu0
        %v1659 = vadd.f32 %v495, %v1658
        %v1660 = vpop.f32.mrf.mxu0
        %1661 = vmatprep.mubr.bf16.mxu0 0
        %1662 = vmatmul.mubr.bf16.gmra.mxu0 %v1187
        %v1663 = vpop.f32.mrf.mxu0
        %v1664 = vadd.f32 %v495, %v1663
        %v1665 = vpop.f32.mrf.mxu0
        %v1666 = vpop.f32.mrf.mxu0
        %v1667 = vadd.f32 %v495, %v1666
        %v1668 = vpop.f32.mrf.mxu0
        %1669 = vmatprep.mubr.bf16.mxu0 0
        %1670 = vmatmul.mubr.bf16.gmra.mxu0 %v1190
        %v1671 = vpop.f32.mrf.mxu0
        %v1672 = vadd.f32 %v495, %v1671
        %v1673 = vpop.f32.mrf.mxu0
        %v1674 = vpop.f32.mrf.mxu0
        %v1675 = vadd.f32 %v495, %v1674
        %v1676 = vpop.f32.mrf.mxu0
        %1677 = vmatprep.mubr.bf16.mxu0 0
        %1678 = vmatmul.mubr.bf16.gmra.mxu0 %v1193
        %v1679 = vpop.f32.mrf.mxu0
        %v1680 = vadd.f32 %v495, %v1679
        %v1681 = vpop.f32.mrf.mxu0
        %v1682 = vpop.f32.mrf.mxu0
        %v1683 = vadd.f32 %v495, %v1682
        %v1684 = vpop.f32.mrf.mxu0
        %1685 = vmatprep.mubr.bf16.mxu0 0
        %1686 = vmatmul.mubr.bf16.gmra.mxu0 %v1196
        %v1687 = vpop.f32.mrf.mxu0
        %v1688 = vadd.f32 %v495, %v1687
        %v1689 = vpop.f32.mrf.mxu0
        %v1690 = vpop.f32.mrf.mxu0
        %v1691 = vadd.f32 %v495, %v1690
        %v1692 = vpop.f32.mrf.mxu0
        %1693 = vmatprep.mubr.bf16.mxu0 0
        %1694 = vmatmul.mubr.bf16.gmra.mxu0 %v1199
        %v1695 = vpop.f32.mrf.mxu0
        %v1696 = vadd.f32 %v495, %v1695
        %v1697 = vpop.f32.mrf.mxu0
        %v1698 = vpop.f32.mrf.mxu0
        %v1699 = vadd.f32 %v495, %v1698
        %v1700 = vpop.f32.mrf.mxu0
        %1701 = vmatprep.mubr.bf16.mxu0 0
        %1702 = vmatmul.mubr.bf16.gmra.mxu0 %v1202
        %v1703 = vpop.f32.mrf.mxu0
        %v1704 = vadd.f32 %v495, %v1703
        %v1705 = vpop.f32.mrf.mxu0
        %v1706 = vpop.f32.mrf.mxu0
        %v1707 = vadd.f32 %v495, %v1706
        %v1708 = vpop.f32.mrf.mxu0
        %1709 = vmatprep.mubr.bf16.mxu0 0
        %1710 = vmatmul.mubr.bf16.gmra.mxu0 %v1205
        %v1711 = vpop.f32.mrf.mxu0
        %v1712 = vadd.f32 %v495, %v1711
        %v1713 = vpop.f32.mrf.mxu0
        %v1714 = vpop.f32.mrf.mxu0
        %v1715 = vadd.f32 %v495, %v1714
        %v1716 = vpop.f32.mrf.mxu0
        %1717 = vmatprep.mubr.bf16.mxu0 0
        %1718 = vmatmul.mubr.bf16.gmra.mxu0 %v1208
        %v1719 = vpop.f32.mrf.mxu0
        %v1720 = vadd.f32 %v495, %v1719
        %v1721 = vpop.f32.mrf.mxu0
        %v1722 = vpop.f32.mrf.mxu0
        %v1723 = vadd.f32 %v495, %v1722
        %v1724 = vpop.f32.mrf.mxu0
        %1725 = vmatprep.mubr.bf16.mxu0 0
        %1726 = vmatmul.mubr.bf16.gmra.mxu0 %v1211
        %v1727 = vpop.f32.mrf.mxu0
        %v1728 = vadd.f32 %v495, %v1727
        %v1729 = vpop.f32.mrf.mxu0
        %v1730 = vpop.f32.mrf.mxu0
        %v1731 = vadd.f32 %v495, %v1730
        %v1732 = vpop.f32.mrf.mxu0
        %1733 = vmatprep.mubr.bf16.mxu0 0
        %1734 = vmatmul.mubr.bf16.gmra.mxu0 %v1214
        %v1735 = vpop.f32.mrf.mxu0
        %v1736 = vadd.f32 %v495, %v1735
        %v1737 = vpop.f32.mrf.mxu0
        %v1738 = vpop.f32.mrf.mxu0
        %v1739 = vadd.f32 %v495, %v1738
        %v1740 = vpop.f32.mrf.mxu0
        %1741 = vmatprep.mubr.bf16.mxu0 0
        %1742 = vmatmul.mubr.bf16.gmra.mxu0 %v1217
        %v1743 = vpop.f32.mrf.mxu0
        %v1744 = vadd.f32 %v495, %v1743
        %v1745 = vpop.f32.mrf.mxu0
        %v1746 = vpop.f32.mrf.mxu0
        %v1747 = vadd.f32 %v495, %v1746
        %v1748 = vpop.f32.mrf.mxu0
        %1749 = vmatprep.mubr.bf16.mxu0 0
        %1750 = vmatmul.mubr.bf16.gmra.mxu0 %v1220
        %v1751 = vpop.f32.mrf.mxu0
        %v1752 = vadd.f32 %v495, %v1751
        %v1753 = vpop.f32.mrf.mxu0
        %v1754 = vpop.f32.mrf.mxu0
        %v1755 = vadd.f32 %v495, %v1754
        %v1756 = vpop.f32.mrf.mxu0
        %1757 = vmatprep.mubr.bf16.mxu0 0
        %1758 = vmatmul.mubr.bf16.gmra.mxu0 %v1223
        %v1759 = vpop.f32.mrf.mxu0
        %v1760 = vadd.f32 %v495, %v1759
        %v1761 = vpop.f32.mrf.mxu0
        %v1762 = vpop.f32.mrf.mxu0
        %v1763 = vadd.f32 %v495, %v1762
        %v1764 = vpop.f32.mrf.mxu0
        %1765 = vmatprep.mubr.bf16.mxu0 0
        %1766 = vmatmul.mubr.bf16.gmra.mxu0 %v1226
        %v1767 = vpop.f32.mrf.mxu0
        %v1768 = vadd.f32 %v495, %v1767
        %v1769 = vpop.f32.mrf.mxu0
        %v1770 = vpop.f32.mrf.mxu0
        %v1771 = vadd.f32 %v495, %v1770
        %v1772 = vpop.f32.mrf.mxu0
        %1773 = vmatprep.mubr.bf16.mxu0 0
        %1774 = vmatmul.mubr.bf16.gmra.mxu0 %v1229
        %v1775 = vpop.f32.mrf.mxu0
        %v1776 = vadd.f32 %v495, %v1775
        %v1777 = vpop.f32.mrf.mxu0
        %v1778 = vpop.f32.mrf.mxu0
        %v1779 = vadd.f32 %v495, %v1778
        %v1780 = vpop.f32.mrf.mxu0
        %1781 = vmatprep.mubr.bf16.mxu0 0
        %1782 = vmatmul.mubr.bf16.gmra.mxu0 %v1232
        %v1783 = vpop.f32.mrf.mxu0
        %v1784 = vadd.f32 %v495, %v1783
        %v1785 = vpop.f32.mrf.mxu0
        %v1786 = vpop.f32.mrf.mxu0
        %v1787 = vadd.f32 %v495, %v1786
        %v1788 = vpop.f32.mrf.mxu0
        %1789 = vmatprep.mubr.bf16.mxu0 0
        %1790 = vmatmul.mubr.bf16.gmra.mxu0 %v1235
        %v1791 = vpop.f32.mrf.mxu0
        %v1792 = vadd.f32 %v495, %v1791
        %v1793 = vpop.f32.mrf.mxu0
        %v1794 = vpop.f32.mrf.mxu0
        %v1795 = vadd.f32 %v495, %v1794
        %v1796 = vpop.f32.mrf.mxu0
        %1797 = vmatprep.mubr.bf16.mxu0 0
        %1798 = vmatmul.mubr.bf16.gmra.mxu0 %v1238
        %v1799 = vpop.f32.mrf.mxu0
        %v1800 = vadd.f32 %v495, %v1799
        %v1801 = vpop.f32.mrf.mxu0
        %v1802 = vpop.f32.mrf.mxu0
        %v1803 = vadd.f32 %v495, %v1802
        %v1804 = vpop.f32.mrf.mxu0
        %1805 = vmatprep.mubr.bf16.mxu0 0
        %1806 = vmatmul.mubr.bf16.gmra.mxu0 %v1241
        %v1807 = vpop.f32.mrf.mxu0
        %v1808 = vadd.f32 %v495, %v1807
        %v1809 = vpop.f32.mrf.mxu0
        %v1810 = vpop.f32.mrf.mxu0
        %v1811 = vadd.f32 %v495, %v1810
        %v1812 = vpop.f32.mrf.mxu0
        %1813 = vmatprep.mubr.bf16.mxu0 0
        %1814 = vmatmul.mubr.bf16.gmra.mxu0 %v1244
        %v1815 = vpop.f32.mrf.mxu0
        %v1816 = vadd.f32 %v495, %v1815
        %v1817 = vpop.f32.mrf.mxu0
        %v1818 = vpop.f32.mrf.mxu0
        %v1819 = vadd.f32 %v495, %v1818
        %v1820 = vpop.f32.mrf.mxu0
        %1821 = vmatprep.mubr.bf16.mxu0 0
        %1822 = vmatmul.mubr.bf16.gmra.mxu0 %v1247
        %v1823 = vpop.f32.mrf.mxu0
        %v1824 = vadd.f32 %v495, %v1823
        %v1825 = vpop.f32.mrf.mxu0
        %v1826 = vpop.f32.mrf.mxu0
        %v1827 = vadd.f32 %v495, %v1826
        %v1828 = vpop.f32.mrf.mxu0
        %1829 = vmatprep.mubr.bf16.mxu0 0
        %1830 = vmatmul.mubr.bf16.gmra.mxu0 %v1250
        %v1831 = vpop.f32.mrf.mxu0
        %v1832 = vadd.f32 %v495, %v1831
        %v1833 = vpop.f32.mrf.mxu0
        %v1834 = vpop.f32.mrf.mxu0
        %v1835 = vadd.f32 %v495, %v1834
        %v1836 = vpop.f32.mrf.mxu0
        %1837 = vmatprep.mubr.bf16.mxu0 0
        %1838 = vmatmul.mubr.bf16.gmra.mxu0 %v1253
        %v1839 = vpop.f32.mrf.mxu0
        %v1840 = vadd.f32 %v495, %v1839
        %v1841 = vpop.f32.mrf.mxu0
        %v1842 = vpop.f32.mrf.mxu0
        %v1843 = vadd.f32 %v495, %v1842
        %v1844 = vpop.f32.mrf.mxu0
        %1845 = vmatprep.mubr.bf16.mxu0 0
        %1846 = vmatmul.mubr.bf16.gmra.mxu0 %v1256
        %v1847 = vpop.f32.mrf.mxu0
        %v1848 = vadd.f32 %v495, %v1847
        %v1849 = vpop.f32.mrf.mxu0
        %v1850 = vpop.f32.mrf.mxu0
        %v1851 = vadd.f32 %v495, %v1850
        %v1852 = vpop.f32.mrf.mxu0
        %1853 = vmatprep.mubr.bf16.mxu0 0
        %1854 = vmatmul.mubr.bf16.gmra.mxu0 %v1259
        %v1855 = vpop.f32.mrf.mxu0
        %v1856 = vadd.f32 %v495, %v1855
        %v1857 = vpop.f32.mrf.mxu0
        %v1858 = vpop.f32.mrf.mxu0
        %v1859 = vadd.f32 %v495, %v1858
        %v1860 = vpop.f32.mrf.mxu0
        %1861 = vmatprep.mubr.bf16.mxu0 0
        %1862 = vmatmul.mubr.bf16.gmra.mxu0 %v1262
        %v1863 = vpop.f32.mrf.mxu0
        %v1864 = vadd.f32 %v495, %v1863
        %v1865 = vpop.f32.mrf.mxu0
        %v1866 = vpop.f32.mrf.mxu0
        %v1867 = vadd.f32 %v495, %v1866
        %v1868 = vpop.f32.mrf.mxu0
        %1869 = vmatprep.mubr.bf16.mxu0 0
        %1870 = vmatmul.mubr.bf16.gmra.mxu0 %v1265
        %v1871 = vpop.f32.mrf.mxu0
        %v1872 = vadd.f32 %v495, %v1871
        %v1873 = vpop.f32.mrf.mxu0
        %v1874 = vpop.f32.mrf.mxu0
        %v1875 = vadd.f32 %v495, %v1874
        %v1876 = vpop.f32.mrf.mxu0
        %1877 = vmatprep.mubr.bf16.mxu0 0
        %1878 = vmatmul.mubr.bf16.gmra.mxu0 %v1268
        %v1879 = vpop.f32.mrf.mxu0
        %v1880 = vadd.f32 %v495, %v1879
        %v1881 = vpop.f32.mrf.mxu0
        %v1882 = vpop.f32.mrf.mxu0
        %v1883 = vadd.f32 %v495, %v1882
        %v1884 = vpop.f32.mrf.mxu0
        %1885 = vmatprep.mubr.bf16.mxu0 0
        %1886 = vmatmul.mubr.bf16.gmra.mxu0 %v1271
        %v1887 = vpop.f32.mrf.mxu0
        %v1888 = vadd.f32 %v495, %v1887
        %v1889 = vpop.f32.mrf.mxu0
        %v1890 = vpop.f32.mrf.mxu0
        %v1891 = vadd.f32 %v495, %v1890
        %v1892 = vpop.f32.mrf.mxu0
        %1893 = vmatprep.mubr.bf16.mxu0 0
        %1894 = vmatmul.mubr.bf16.gmra.mxu0 %v1274
        %v1895 = vpop.f32.mrf.mxu0
        %v1896 = vadd.f32 %v495, %v1895
        %v1897 = vpop.f32.mrf.mxu0
        %v1898 = vpop.f32.mrf.mxu0
        %v1899 = vadd.f32 %v495, %v1898
        %v1900 = vpop.f32.mrf.mxu0
        %1901 = vmatprep.mubr.bf16.mxu0 0
        %1902 = vmatmul.mubr.bf16.gmra.mxu0 %v1277
        %v1903 = vpop.f32.mrf.mxu0
        %v1904 = vadd.f32 %v495, %v1903
        %v1905 = vpop.f32.mrf.mxu0
        %v1906 = vpop.f32.mrf.mxu0
        %v1907 = vadd.f32 %v495, %v1906
        %v1908 = vpop.f32.mrf.mxu0
        %1909 = vmatprep.mubr.bf16.mxu0 0
        %1910 = vmatmul.mubr.bf16.gmra.mxu0 %v1280
        %v1911 = vpop.f32.mrf.mxu0
        %v1912 = vadd.f32 %v495, %v1911
        %v1913 = vpop.f32.mrf.mxu0
        %v1914 = vpop.f32.mrf.mxu0
        %v1915 = vadd.f32 %v495, %v1914
        %v1916 = vpop.f32.mrf.mxu0
        %1917 = vmatprep.mubr.bf16.mxu0 0
        %1918 = vmatmul.mubr.bf16.gmra.mxu0 %v1283
        %v1919 = vpop.f32.mrf.mxu0
        %v1920 = vadd.f32 %v495, %v1919
        %v1921 = vpop.f32.mrf.mxu0
        %v1922 = vpop.f32.mrf.mxu0
        %v1923 = vadd.f32 %v495, %v1922
        %v1924 = vpop.f32.mrf.mxu0
        %1925 = vmatprep.mubr.bf16.mxu0 0
        %1926 = vmatmul.mubr.bf16.gmra.mxu0 %v1286
        %v1927 = vpop.f32.mrf.mxu0
        %v1928 = vadd.f32 %v495, %v1927
        %v1929 = vpop.f32.mrf.mxu0
        %v1930 = vpop.f32.mrf.mxu0
        %v1931 = vadd.f32 %v495, %v1930
        %v1932 = vpop.f32.mrf.mxu0
        %1933 = vmatprep.mubr.bf16.mxu0 0
        %1934 = vmatmul.mubr.bf16.gmra.mxu0 %v1289
        %v1935 = vpop.f32.mrf.mxu0
        %v1936 = vadd.f32 %v495, %v1935
        %v1937 = vpop.f32.mrf.mxu0
        %v1938 = vpop.f32.mrf.mxu0
        %v1939 = vadd.f32 %v495, %v1938
        %v1940 = vpop.f32.mrf.mxu0
        %1941 = vmatprep.mubr.bf16.mxu0 0
        %1942 = vmatmul.mubr.bf16.gmra.mxu0 %v1292
        %v1943 = vpop.f32.mrf.mxu0
        %v1944 = vadd.f32 %v495, %v1943
        %v1945 = vpop.f32.mrf.mxu0
        %v1946 = vpop.f32.mrf.mxu0
        %v1947 = vadd.f32 %v495, %v1946
        %v1948 = vpop.f32.mrf.mxu0
        %1949 = vmatprep.mubr.bf16.mxu0 0
        %1950 = vmatmul.mubr.bf16.gmra.mxu0 %v1295
        %v1951 = vpop.f32.mrf.mxu0
        %v1952 = vadd.f32 %v495, %v1951
        %v1953 = vpop.f32.mrf.mxu0
        %v1954 = vpop.f32.mrf.mxu0
        %v1955 = vadd.f32 %v495, %v1954
        %v1956 = vpop.f32.mrf.mxu0
        %1957 = vmatprep.mubr.bf16.mxu0 0
        %1958 = vmatmul.mubr.bf16.gmra.mxu0 %v1298
        %v1959 = vpop.f32.mrf.mxu0
        %v1960 = vadd.f32 %v495, %v1959
        %v1961 = vpop.f32.mrf.mxu0
        %v1962 = vpop.f32.mrf.mxu0
        %v1963 = vadd.f32 %v495, %v1962
        %v1964 = vpop.f32.mrf.mxu0
        %1965 = vmatprep.mubr.bf16.mxu0 0
        %1966 = vmatmul.mubr.bf16.gmra.mxu0 %v1301
        %v1967 = vpop.f32.mrf.mxu0
        %v1968 = vadd.f32 %v495, %v1967
        %v1969 = vpop.f32.mrf.mxu0
        %v1970 = vpop.f32.mrf.mxu0
        %v1971 = vadd.f32 %v495, %v1970
        %v1972 = vpop.f32.mrf.mxu0
        %1973 = vmatprep.mubr.bf16.mxu0 0
        %1974 = vmatmul.mubr.bf16.gmra.mxu0 %v1304
        %v1975 = vpop.f32.mrf.mxu0
        %v1976 = vadd.f32 %v495, %v1975
        %v1977 = vpop.f32.mrf.mxu0
        %v1978 = vpop.f32.mrf.mxu0
        %v1979 = vadd.f32 %v495, %v1978
        %v1980 = vpop.f32.mrf.mxu0
        %1981 = vmatprep.mubr.bf16.mxu0 0
        %1982 = vmatmul.mubr.bf16.gmra.mxu0 %v1307
        %v1983 = vpop.f32.mrf.mxu0
        %v1984 = vadd.f32 %v495, %v1983
        %v1985 = vpop.f32.mrf.mxu0
        %v1986 = vpop.f32.mrf.mxu0
        %v1987 = vadd.f32 %v495, %v1986
        %v1988 = vpop.f32.mrf.mxu0
        %1989 = vmatprep.mubr.bf16.mxu0 0
        %1990 = vmatmul.mubr.bf16.gmra.mxu0 %v1310
        %v1991 = vpop.f32.mrf.mxu0
        %v1992 = vadd.f32 %v495, %v1991
        %v1993 = vpop.f32.mrf.mxu0
        %v1994 = vpop.f32.mrf.mxu0
        %v1995 = vadd.f32 %v495, %v1994
        %v1996 = vpop.f32.mrf.mxu0
        %1997 = vmatprep.mubr.bf16.mxu0 0
        %1998 = vmatmul.mubr.bf16.gmra.mxu0 %v1313
        %v1999 = vpop.f32.mrf.mxu0
        %v2000 = vadd.f32 %v495, %v1999
        %v2001 = vpop.f32.mrf.mxu0
        %v2002 = vpop.f32.mrf.mxu0
        %v2003 = vadd.f32 %v495, %v2002
        %v2004 = vpop.f32.mrf.mxu0
        %2005 = vmatprep.mubr.bf16.mxu0 0
        %2006 = vmatmul.mubr.bf16.gmra.mxu0 %v1316
        %v2007 = vpop.f32.mrf.mxu0
        %v2008 = vadd.f32 %v495, %v2007
        %v2009 = vpop.f32.mrf.mxu0
        %v2010 = vpop.f32.mrf.mxu0
        %v2011 = vadd.f32 %v495, %v2010
        %v2012 = vpop.f32.mrf.mxu0
        %2013 = vmatprep.mubr.bf16.mxu0 0
        %2014 = vmatmul.mubr.bf16.gmra.mxu0 %v1319
        %v2015 = vpop.f32.mrf.mxu0
        %v2016 = vadd.f32 %v495, %v2015
        %v2017 = vpop.f32.mrf.mxu0
        %v2018 = vpop.f32.mrf.mxu0
        %v2019 = vadd.f32 %v495, %v2018
        %v2020 = vpop.f32.mrf.mxu0
        %2021 = vmatprep.mubr.bf16.mxu0 0
        %2022 = vmatmul.mubr.bf16.gmra.mxu0 %v1322
        %v2023 = vpop.f32.mrf.mxu0
        %v2024 = vadd.f32 %v495, %v2023
        %v2025 = vpop.f32.mrf.mxu0
        %v2026 = vpop.f32.mrf.mxu0
        %v2027 = vadd.f32 %v495, %v2026
        %v2028 = vpop.f32.mrf.mxu0
        %2029 = vmatprep.mubr.bf16.mxu0 0
        %2030 = vmatmul.mubr.bf16.gmra.mxu0 %v1325
        %v2031 = vpop.f32.mrf.mxu0
        %v2032 = vadd.f32 %v495, %v2031
        %v2033 = vpop.f32.mrf.mxu0
        %v2034 = vpop.f32.mrf.mxu0
        %v2035 = vadd.f32 %v495, %v2034
        %v2036 = vpop.f32.mrf.mxu0
        %2037 = vmatprep.mubr.bf16.mxu0 0
        %2038 = vmatmul.mubr.bf16.gmra.mxu0 %v1328
        %v2039 = vpop.f32.mrf.mxu0
        %v2040 = vadd.f32 %v495, %v2039
        %v2041 = vpop.f32.mrf.mxu0
        %v2042 = vpop.f32.mrf.mxu0
        %v2043 = vadd.f32 %v495, %v2042
        %v2044 = vpop.f32.mrf.mxu0
        %2045 = vmatprep.mubr.bf16.mxu0 0
        %2046 = vmatmul.mubr.bf16.gmra.mxu0 %v1331
        %v2047 = vpop.f32.mrf.mxu0
        %v2048 = vadd.f32 %v495, %v2047
        %v2049 = vpop.f32.mrf.mxu0
        %v2050 = vpop.f32.mrf.mxu0
        %v2051 = vadd.f32 %v495, %v2050
        %v2052 = vpop.f32.mrf.mxu0
        %2053 = vmatprep.mubr.bf16.mxu0 0
        %2054 = vmatmul.mubr.bf16.gmra.mxu0 %v1334
        %v2055 = vpop.f32.mrf.mxu0
        %v2056 = vadd.f32 %v495, %v2055
        %v2057 = vpop.f32.mrf.mxu0
        %v2058 = vpop.f32.mrf.mxu0
        %v2059 = vadd.f32 %v495, %v2058
        %v2060 = vpop.f32.mrf.mxu0
        %2061 = vmatprep.mubr.bf16.mxu0 0
        %2062 = vmatmul.mubr.bf16.gmra.mxu0 %v1337
        %v2063 = vpop.f32.mrf.mxu0
        %v2064 = vadd.f32 %v495, %v2063
        %v2065 = vpop.f32.mrf.mxu0
        %v2066 = vpop.f32.mrf.mxu0
        %v2067 = vadd.f32 %v495, %v2066
        %v2068 = vpop.f32.mrf.mxu0
        %2069 = vmatprep.mubr.bf16.mxu0 0
        %2070 = vmatmul.mubr.bf16.gmra.mxu0 %v1340
        %v2071 = vpop.f32.mrf.mxu0
        %v2072 = vadd.f32 %v495, %v2071
        %v2073 = vpop.f32.mrf.mxu0
        %v2074 = vpop.f32.mrf.mxu0
        %v2075 = vadd.f32 %v495, %v2074
        %v2076 = vpop.f32.mrf.mxu0
        %2077 = vmatprep.mubr.bf16.mxu0 0
        %2078 = vmatmul.mubr.bf16.gmra.mxu0 %v1343
        %v2079 = vpop.f32.mrf.mxu0
        %v2080 = vadd.f32 %v495, %v2079
        %v2081 = vpop.f32.mrf.mxu0
        %v2082 = vpop.f32.mrf.mxu0
        %v2083 = vadd.f32 %v495, %v2082
        %v2084 = vpop.f32.mrf.mxu0
        %2085 = vmatprep.mubr.bf16.mxu0 0
        %2086 = vmatmul.mubr.bf16.gmra.mxu0 %v1346
        %v2087 = vpop.f32.mrf.mxu0
        %v2088 = vadd.f32 %v495, %v2087
        %v2089 = vpop.f32.mrf.mxu0
        %v2090 = vpop.f32.mrf.mxu0
        %v2091 = vadd.f32 %v495, %v2090
        %v2092 = vpop.f32.mrf.mxu0
        %2093 = vmatprep.mubr.bf16.mxu0 0
        %2094 = vmatmul.mubr.bf16.gmra.mxu0 %v1349
        %v2095 = vpop.f32.mrf.mxu0
        %v2096 = vadd.f32 %v495, %v2095
        %v2097 = vpop.f32.mrf.mxu0
        %v2098 = vpop.f32.mrf.mxu0
        %v2099 = vadd.f32 %v495, %v2098
        %v2100 = vpop.f32.mrf.mxu0
        %2101 = vmatprep.mubr.bf16.mxu0 0
        %2102 = vmatmul.mubr.bf16.gmra.mxu0 %v1352
        %v2103 = vpop.f32.mrf.mxu0
        %v2104 = vadd.f32 %v495, %v2103
        %v2105 = vpop.f32.mrf.mxu0
        %v2106 = vpop.f32.mrf.mxu0
        %v2107 = vadd.f32 %v495, %v2106
        %v2108 = vpop.f32.mrf.mxu0
        %2109 = vmatprep.mubr.bf16.mxu0 0
        %2110 = vmatmul.mubr.bf16.gmra.mxu0 %v1355
        %v2111 = vpop.f32.mrf.mxu0
        %v2112 = vadd.f32 %v495, %v2111
        %v2113 = vpop.f32.mrf.mxu0
        %v2114 = vpop.f32.mrf.mxu0
        %v2115 = vadd.f32 %v495, %v2114
        %v2116 = vpop.f32.mrf.mxu0
        %2117 = vmatprep.mubr.bf16.mxu0 0
        %2118 = vmatmul.mubr.bf16.gmra.mxu0 %v1358
        %v2119 = vpop.f32.mrf.mxu0
        %v2120 = vadd.f32 %v495, %v2119
        %v2121 = vpop.f32.mrf.mxu0
        %v2122 = vpop.f32.mrf.mxu0
        %v2123 = vadd.f32 %v495, %v2122
        %v2124 = vpop.f32.mrf.mxu0
        %2125 = vmatprep.mubr.bf16.mxu0 0
        %2126 = vmatmul.mubr.bf16.gmra.mxu0 %v1361
        %v2127 = vpop.f32.mrf.mxu0
        %v2128 = vadd.f32 %v495, %v2127
        %v2129 = vpop.f32.mrf.mxu0
        %v2130 = vpop.f32.mrf.mxu0
        %v2131 = vadd.f32 %v495, %v2130
        %v2132 = vpop.f32.mrf.mxu0
        %2133 = vmatprep.mubr.bf16.mxu0 0
        %2134 = vmatmul.mubr.bf16.gmra.mxu0 %v1364
        %v2135 = vpop.f32.mrf.mxu0
        %v2136 = vadd.f32 %v495, %v2135
        %v2137 = vpop.f32.mrf.mxu0
        %v2138 = vpop.f32.mrf.mxu0
        %v2139 = vadd.f32 %v495, %v2138
        %v2140 = vpop.f32.mrf.mxu0
        %2141 = vmatprep.mubr.bf16.mxu0 0
        %2142 = vmatmul.mubr.bf16.gmra.mxu0 %v1367
        %v2143 = vpop.f32.mrf.mxu0
        %v2144 = vadd.f32 %v495, %v2143
        %v2145 = vpop.f32.mrf.mxu0
        %v2146 = vpop.f32.mrf.mxu0
        %v2147 = vadd.f32 %v495, %v2146
        %v2148 = vpop.f32.mrf.mxu0
        %2149 = vmatprep.mubr.bf16.mxu0 0
        %2150 = vmatmul.mubr.bf16.gmra.mxu0 %v1370
        %v2151 = vpop.f32.mrf.mxu0
        %v2152 = vadd.f32 %v495, %v2151
        %v2153 = vpop.f32.mrf.mxu0
        %v2154 = vpop.f32.mrf.mxu0
        %v2155 = vadd.f32 %v495, %v2154
        %v2156 = vpop.f32.mrf.mxu0
        %2157 = vmatprep.mubr.bf16.mxu0 0
        %2158 = vmatmul.mubr.bf16.gmra.mxu0 %v1373
        %v2159 = vpop.f32.mrf.mxu0
        %v2160 = vadd.f32 %v495, %v2159
        %v2161 = vpop.f32.mrf.mxu0
        %v2162 = vpop.f32.mrf.mxu0
        %v2163 = vadd.f32 %v495, %v2162
        %v2164 = vpop.f32.mrf.mxu0
        %2165 = vmatprep.mubr.bf16.mxu0 0
        %2166 = vmatmul.mubr.bf16.gmra.mxu0 %v1376
        %v2167 = vpop.f32.mrf.mxu0
        %v2168 = vadd.f32 %v495, %v2167
        %v2169 = vpop.f32.mrf.mxu0
        %v2170 = vpop.f32.mrf.mxu0
        %v2171 = vadd.f32 %v495, %v2170
        %v2172 = vpop.f32.mrf.mxu0
        %2173 = vmatprep.mubr.bf16.mxu0 0
        %2174 = vmatmul.mubr.bf16.gmra.mxu0 %v1379
        %v2175 = vpop.f32.mrf.mxu0
        %v2176 = vadd.f32 %v495, %v2175
        %v2177 = vpop.f32.mrf.mxu0
        %v2178 = vpop.f32.mrf.mxu0
        %v2179 = vadd.f32 %v495, %v2178
        %v2180 = vpop.f32.mrf.mxu0
        %2181 = vmatprep.mubr.bf16.mxu0 0
        %2182 = vmatmul.mubr.bf16.gmra.mxu0 %v1382
        %v2183 = vpop.f32.mrf.mxu0
        %v2184 = vadd.f32 %v495, %v2183
        %v2185 = vpop.f32.mrf.mxu0
        %v2186 = vpop.f32.mrf.mxu0
        %v2187 = vadd.f32 %v495, %v2186
        %v2188 = vpop.f32.mrf.mxu0
        %2189 = vmatprep.mubr.bf16.mxu0 0
        %2190 = vmatmul.mubr.bf16.gmra.mxu0 %v1385
        %v2191 = vpop.f32.mrf.mxu0
        %v2192 = vadd.f32 %v495, %v2191
        %v2193 = vpop.f32.mrf.mxu0
        %v2194 = vpop.f32.mrf.mxu0
        %v2195 = vadd.f32 %v495, %v2194
        %v2196 = vpop.f32.mrf.mxu0
        %2197 = vmatprep.mubr.bf16.mxu0 0
        %2198 = vmatmul.mubr.bf16.gmra.mxu0 %v1388
        %v2199 = vpop.f32.mrf.mxu0
        %v2200 = vadd.f32 %v495, %v2199
        %v2201 = vpop.f32.mrf.mxu0
        %v2202 = vpop.f32.mrf.mxu0
        %v2203 = vadd.f32 %v495, %v2202
        %v2204 = vpop.f32.mrf.mxu0
        %2205 = vmatprep.mubr.bf16.mxu0 0
        %2206 = vmatmul.mubr.bf16.gmra.mxu0 %v1391
        %v2207 = vpop.f32.mrf.mxu0
        %v2208 = vadd.f32 %v495, %v2207
        %v2209 = vpop.f32.mrf.mxu0
        %v2210 = vpop.f32.mrf.mxu0
        %v2211 = vadd.f32 %v495, %v2210
        %v2212 = vpop.f32.mrf.mxu0
        %2213 = vmatprep.mubr.bf16.mxu0 0
        %2214 = vmatmul.mubr.bf16.gmra.mxu0 %v1394
        %v2215 = vpop.f32.mrf.mxu0
        %v2216 = vadd.f32 %v495, %v2215
        %v2217 = vpop.f32.mrf.mxu0
        %v2218 = vpop.f32.mrf.mxu0
        %v2219 = vadd.f32 %v495, %v2218
        %v2220 = vpop.f32.mrf.mxu0
        %2221 = vmatprep.mubr.bf16.mxu0 0
        %2222 = vmatmul.mubr.bf16.gmra.mxu0 %v1397
        %v2223 = vpop.f32.mrf.mxu0
        %v2224 = vadd.f32 %v495, %v2223
        %v2225 = vpop.f32.mrf.mxu0
        %v2226 = vpop.f32.mrf.mxu0
        %v2227 = vadd.f32 %v495, %v2226
        %v2228 = vpop.f32.mrf.mxu0
        %2229 = vmatprep.mubr.bf16.mxu0 0
        %2230 = vmatmul.mubr.bf16.gmra.mxu0 %v1400
        %v2231 = vpop.f32.mrf.mxu0
        %v2232 = vadd.f32 %v495, %v2231
        %v2233 = vpop.f32.mrf.mxu0
        %v2234 = vpop.f32.mrf.mxu0
        %v2235 = vadd.f32 %v495, %v2234
        %v2236 = vpop.f32.mrf.mxu0
        %2237 = vmatprep.mubr.bf16.mxu0 0
        %2238 = vmatmul.mubr.bf16.gmra.mxu0 %v1403
        %v2239 = vpop.f32.mrf.mxu0
        %v2240 = vadd.f32 %v495, %v2239
        %v2241 = vpop.f32.mrf.mxu0
        %v2242 = vpop.f32.mrf.mxu0
        %v2243 = vadd.f32 %v495, %v2242
        %v2244 = vpop.f32.mrf.mxu0
        %2245 = vmatprep.mubr.bf16.mxu0 0
        %2246 = vmatmul.mubr.bf16.gmra.mxu0 %v1406
        %v2247 = vpop.f32.mrf.mxu0
        %v2248 = vadd.f32 %v495, %v2247
        %v2249 = vpop.f32.mrf.mxu0
        %v2250 = vpop.f32.mrf.mxu0
        %v2251 = vadd.f32 %v495, %v2250
        %v2252 = vpop.f32.mrf.mxu0
        %2253 = vmatprep.mubr.bf16.mxu0 0
        %2254 = vmatmul.mubr.bf16.gmra.mxu0 %v1409
        %v2255 = vpop.f32.mrf.mxu0
        %v2256 = vadd.f32 %v495, %v2255
        %v2257 = vpop.f32.mrf.mxu0
        %v2258 = vpop.f32.mrf.mxu0
        %v2259 = vadd.f32 %v495, %v2258
        %v2260 = vpop.f32.mrf.mxu0
        %2261 = vmatprep.mubr.bf16.mxu0 0
        %2262 = vmatmul.mubr.bf16.gmra.mxu0 %v1412
        %v2263 = vpop.f32.mrf.mxu0
        %v2264 = vadd.f32 %v495, %v2263
        %v2265 = vpop.f32.mrf.mxu0
        %v2266 = vpop.f32.mrf.mxu0
        %v2267 = vadd.f32 %v495, %v2266
        %v2268 = vpop.f32.mrf.mxu0
        %2269 = vmatprep.mubr.bf16.mxu0 0
        %2270 = vmatmul.mubr.bf16.gmra.mxu0 %v1415
        %v2271 = vpop.f32.mrf.mxu0
        %v2272 = vadd.f32 %v495, %v2271
        %v2273 = vpop.f32.mrf.mxu0
        %v2274 = vpop.f32.mrf.mxu0
        %v2275 = vadd.f32 %v495, %v2274
        %v2276 = vpop.f32.mrf.mxu0
        %2277 = vmatprep.mubr.bf16.mxu0 0
        %2278 = vmatmul.mubr.bf16.gmra.mxu0 %v1418
        %v2279 = vpop.f32.mrf.mxu0
        %v2280 = vadd.f32 %v495, %v2279
        %v2281 = vpop.f32.mrf.mxu0
        %v2282 = vpop.f32.mrf.mxu0
        %v2283 = vadd.f32 %v495, %v2282
        %v2284 = vpop.f32.mrf.mxu0
        %2285 = vmatprep.mubr.bf16.mxu0 0
        %2286 = vmatmul.mubr.bf16.gmra.mxu0 %v1421
        %v2287 = vpop.f32.mrf.mxu0
        %v2288 = vadd.f32 %v495, %v2287
        %v2289 = vpop.f32.mrf.mxu0
        %v2290 = vpop.f32.mrf.mxu0
        %v2291 = vadd.f32 %v495, %v2290
        %v2292 = vpop.f32.mrf.mxu0
        %2293 = vmatprep.mubr.bf16.mxu0 0
        %2294 = vmatmul.mubr.bf16.gmra.mxu0 %v1424
        %v2295 = vpop.f32.mrf.mxu0
        %v2296 = vadd.f32 %v495, %v2295
        %v2297 = vpop.f32.mrf.mxu0
        %v2298 = vpop.f32.mrf.mxu0
        %v2299 = vadd.f32 %v495, %v2298
        %v2300 = vpop.f32.mrf.mxu0
        %2301 = vmatprep.mubr.bf16.mxu0 0
        %2302 = vmatmul.mubr.bf16.gmra.mxu0 %v1427
        %v2303 = vpop.f32.mrf.mxu0
        %v2304 = vadd.f32 %v495, %v2303
        %v2305 = vpop.f32.mrf.mxu0
        %v2306 = vpop.f32.mrf.mxu0
        %v2307 = vadd.f32 %v495, %v2306
        %v2308 = vpop.f32.mrf.mxu0
        %2309 = vmatprep.mubr.bf16.mxu0 0
        %2310 = vmatmul.mubr.bf16.gmra.mxu0 %v1430
        %v2311 = vpop.f32.mrf.mxu0
        %v2312 = vadd.f32 %v495, %v2311
        %v2313 = vpop.f32.mrf.mxu0
        %v2314 = vpop.f32.mrf.mxu0
        %v2315 = vadd.f32 %v495, %v2314
        %v2316 = vpop.f32.mrf.mxu0
        %2317 = vmatprep.mubr.bf16.mxu0 0
        %2318 = vmatmul.mubr.bf16.gmra.mxu0 %v1433
        %v2319 = vpop.f32.mrf.mxu0
        %v2320 = vadd.f32 %v495, %v2319
        %v2321 = vpop.f32.mrf.mxu0
        %v2322 = vpop.f32.mrf.mxu0
        %v2323 = vadd.f32 %v495, %v2322
        %v2324 = vpop.f32.mrf.mxu0
        %2325 = vmatprep.mubr.bf16.mxu0 0
        %2326 = vmatmul.mubr.bf16.gmra.mxu0 %v1436
        %v2327 = vpop.f32.mrf.mxu0
        %v2328 = vadd.f32 %v495, %v2327
        %v2329 = vpop.f32.mrf.mxu0
        %v2330 = vpop.f32.mrf.mxu0
        %v2331 = vadd.f32 %v495, %v2330
        %v2332 = vpop.f32.mrf.mxu0
        %2333 = vmatprep.mubr.bf16.mxu0 0
        %2334 = vmatmul.mubr.bf16.gmra.mxu0 %v1439
        %v2335 = vpop.f32.mrf.mxu0
        %v2336 = vadd.f32 %v495, %v2335
        %v2337 = vpop.f32.mrf.mxu0
        %v2338 = vpop.f32.mrf.mxu0
        %v2339 = vadd.f32 %v495, %v2338
        %v2340 = vpop.f32.mrf.mxu0
        %2341 = vmatprep.mubr.bf16.mxu0 0
        %2342 = vmatmul.mubr.bf16.gmra.mxu0 %v1442
        %v2343 = vpop.f32.mrf.mxu0
        %v2344 = vadd.f32 %v495, %v2343
        %v2345 = vpop.f32.mrf.mxu0
        %v2346 = vpop.f32.mrf.mxu0
        %v2347 = vadd.f32 %v495, %v2346
        %v2348 = vpop.f32.mrf.mxu0
        %2349 = vmatprep.mubr.bf16.mxu0 0
        %2350 = vmatmul.mubr.bf16.gmra.mxu0 %v1445
        %v2351 = vpop.f32.mrf.mxu0
        %v2352 = vadd.f32 %v495, %v2351
        %v2353 = vpop.f32.mrf.mxu0
        %v2354 = vpop.f32.mrf.mxu0
        %v2355 = vadd.f32 %v495, %v2354
        %v2356 = vpop.f32.mrf.mxu0
        %2357 = vmatprep.mubr.bf16.mxu0 0
        %2358 = vmatmul.mubr.bf16.gmra.mxu0 %v1448
        %v2359 = vpop.f32.mrf.mxu0
        %v2360 = vadd.f32 %v495, %v2359
        %v2361 = vpop.f32.mrf.mxu0
        %v2362 = vpop.f32.mrf.mxu0
        %v2363 = vadd.f32 %v495, %v2362
        %v2364 = vpop.f32.mrf.mxu0
        %2365 = vmatprep.mubr.bf16.mxu0 0
        %2366 = vmatmul.mubr.bf16.gmra.mxu0 %v1451
        %v2367 = vpop.f32.mrf.mxu0
        %v2368 = vadd.f32 %v495, %v2367
        %v2369 = vpop.f32.mrf.mxu0
        %v2370 = vpop.f32.mrf.mxu0
        %v2371 = vadd.f32 %v495, %v2370
        %v2372 = vpop.f32.mrf.mxu0
        %2373 = vmatprep.mubr.bf16.mxu0 0
        %2374 = vmatmul.mubr.bf16.gmra.mxu0 %v1454
        %v2375 = vpop.f32.mrf.mxu0
        %v2376 = vadd.f32 %v495, %v2375
        %v2377 = vpop.f32.mrf.mxu0
        %v2378 = vpop.f32.mrf.mxu0
        %v2379 = vadd.f32 %v495, %v2378
        %v2380 = vpop.f32.mrf.mxu0
        %2381 = vmatprep.mubr.bf16.mxu0 0
        %2382 = vmatmul.mubr.bf16.gmra.mxu0 %v1457
        %v2383 = vpop.f32.mrf.mxu0
        %v2384 = vadd.f32 %v495, %v2383
        %v2385 = vpop.f32.mrf.mxu0
        %v2386 = vpop.f32.mrf.mxu0
        %v2387 = vadd.f32 %v495, %v2386
        %v2388 = vpop.f32.mrf.mxu0
        %2389 = vmatprep.mubr.bf16.mxu0 0
        %2390 = vmatmul.mubr.bf16.gmra.mxu0 %v1460
        %v2391 = vpop.f32.mrf.mxu0
        %v2392 = vadd.f32 %v495, %v2391
        %v2393 = vpop.f32.mrf.mxu0
        %v2394 = vpop.f32.mrf.mxu0
        %v2395 = vadd.f32 %v495, %v2394
        %v2396 = vpop.f32.mrf.mxu0
        %2397 = vmatprep.mubr.bf16.mxu0 0
        %2398 = vmatmul.mubr.bf16.gmra.mxu0 %v1463
        %v2399 = vpop.f32.mrf.mxu0
        %v2400 = vadd.f32 %v495, %v2399
        %v2401 = vpop.f32.mrf.mxu0
        %v2402 = vpop.f32.mrf.mxu0
        %v2403 = vadd.f32 %v495, %v2402
        %v2404 = vpop.f32.mrf.mxu0
        %2405 = vmatprep.mubr.bf16.mxu0 0
        %2406 = vmatmul.mubr.bf16.gmra.mxu0 %v1466
        %v2407 = vpop.f32.mrf.mxu0
        %v2408 = vadd.f32 %v495, %v2407
        %v2409 = vpop.f32.mrf.mxu0
        %v2410 = vpop.f32.mrf.mxu0
        %v2411 = vadd.f32 %v495, %v2410
        %v2412 = vpop.f32.mrf.mxu0
        %2413 = vmatprep.mubr.bf16.mxu0 0
        %2414 = vmatmul.mubr.bf16.gmra.mxu0 %v1469
        %v2415 = vpop.f32.mrf.mxu0
        %v2416 = vadd.f32 %v495, %v2415
        %v2417 = vpop.f32.mrf.mxu0
        %v2418 = vpop.f32.mrf.mxu0
        %v2419 = vadd.f32 %v495, %v2418
        %v2420 = vpop.f32.mrf.mxu0
        %2421 = vmatprep.mubr.bf16.mxu0 0
        %2422 = vmatmul.mubr.bf16.gmra.mxu0 %v1472
        %v2423 = vpop.f32.mrf.mxu0
        %v2424 = vadd.f32 %v495, %v2423
        %v2425 = vpop.f32.mrf.mxu0
        %v2426 = vpop.f32.mrf.mxu0
        %v2427 = vadd.f32 %v495, %v2426
        %v2428 = vpop.f32.mrf.mxu0
        %2429 = vmatprep.mubr.bf16.mxu0 0
        %2430 = vmatmul.mubr.bf16.gmra.mxu0 %v1475
        %v2431 = vpop.f32.mrf.mxu0
        %v2432 = vadd.f32 %v495, %v2431
        %v2433 = vpop.f32.mrf.mxu0
        %v2434 = vpop.f32.mrf.mxu0
        %v2435 = vadd.f32 %v495, %v2434
        %v2436 = vpop.f32.mrf.mxu0
        %2437 = vmatprep.mubr.bf16.mxu0 0
        %2438 = vmatmul.mubr.bf16.gmra.mxu0 %v1478
        %v2439 = vpop.f32.mrf.mxu0
        %v2440 = vadd.f32 %v495, %v2439
        %v2441 = vpop.f32.mrf.mxu0
        %v2442 = vpop.f32.mrf.mxu0
        %v2443 = vadd.f32 %v495, %v2442
        %v2444 = vpop.f32.mrf.mxu0
        %2445 = vmatprep.mubr.bf16.mxu0 0
        %2446 = vmatmul.mubr.bf16.gmra.mxu0 %v1481
        %v2447 = vpop.f32.mrf.mxu0
        %v2448 = vadd.f32 %v495, %v2447
        %v2449 = vpop.f32.mrf.mxu0
        %v2450 = vpop.f32.mrf.mxu0
        %v2451 = vadd.f32 %v495, %v2450
        %v2452 = vpop.f32.mrf.mxu0
        %2453 = vmatprep.mubr.bf16.mxu0 0
        %2454 = vmatmul.mubr.bf16.gmra.mxu0 %v1484
        %v2455 = vpop.f32.mrf.mxu0
        %v2456 = vadd.f32 %v495, %v2455
        %v2457 = vpop.f32.mrf.mxu0
        %v2458 = vpop.f32.mrf.mxu0
        %v2459 = vadd.f32 %v495, %v2458
        %v2460 = vpop.f32.mrf.mxu0
        %2461 = vmatprep.mubr.bf16.mxu0 0
        %2462 = vmatmul.mubr.bf16.gmra.mxu0 %v1487
        %v2463 = vpop.f32.mrf.mxu0
        %v2464 = vadd.f32 %v495, %v2463
        %v2465 = vpop.f32.mrf.mxu0
        %v2466 = vpop.f32.mrf.mxu0
        %v2467 = vadd.f32 %v495, %v2466
        %v2468 = vpop.f32.mrf.mxu0
        %2469 = vmatprep.mubr.bf16.mxu0 0
        %2470 = vmatmul.mubr.bf16.gmra.mxu0 %v1490
        %v2471 = vpop.f32.mrf.mxu0
        %v2472 = vadd.f32 %v495, %v2471
        %v2473 = vpop.f32.mrf.mxu0
        %v2474 = vpop.f32.mrf.mxu0
        %v2475 = vadd.f32 %v495, %v2474
        %v2476 = vpop.f32.mrf.mxu0
        %2477 = vmatprep.mubr.bf16.mxu0 0
        %2478 = vmatmul.mubr.bf16.gmra.mxu0 %v1493
        %v2479 = vpop.f32.mrf.mxu0
        %v2480 = vadd.f32 %v495, %v2479
        %v2481 = vpop.f32.mrf.mxu0
        %v2482 = vpop.f32.mrf.mxu0
        %v2483 = vadd.f32 %v495, %v2482
        %v2484 = vpop.f32.mrf.mxu0
        %2485 = vmatprep.mubr.bf16.mxu0 0
        %2486 = vmatmul.mubr.bf16.gmra.mxu0 %v1496
        %v2487 = vpop.f32.mrf.mxu0
        %v2488 = vadd.f32 %v495, %v2487
        %v2489 = vpop.f32.mrf.mxu0
        %v2490 = vpop.f32.mrf.mxu0
        %v2491 = vadd.f32 %v495, %v2490
        %v2492 = vpop.f32.mrf.mxu0
        %2493 = vmatprep.mubr.bf16.mxu0 0
        %2494 = vmatmul.mubr.bf16.gmra.mxu0 %v1499
        %v2495 = vpop.f32.mrf.mxu0
        %v2496 = vadd.f32 %v495, %v2495
        %v2497 = vpop.f32.mrf.mxu0
        %v2498 = vpop.f32.mrf.mxu0
        %v2499 = vadd.f32 %v495, %v2498
        %v2500 = vpop.f32.mrf.mxu0
        %2501 = vmatprep.mubr.bf16.mxu0 0
        %2502 = vmatmul.mubr.bf16.gmra.mxu0 %v1502
        %v2503 = vpop.f32.mrf.mxu0
        %v2504 = vadd.f32 %v495, %v2503
        %v2505 = vpop.f32.mrf.mxu0
        %v2506 = vpop.f32.mrf.mxu0
        %v2507 = vadd.f32 %v495, %v2506
        %v2508 = vpop.f32.mrf.mxu0
        %2509 = vmatprep.mubr.bf16.mxu0 0
        %2510 = vmatmul.mubr.bf16.gmra.mxu0 %v1505
        %v2511 = vpop.f32.mrf.mxu0
        %v2512 = vadd.f32 %v495, %v2511
        %v2513 = vpop.f32.mrf.mxu0
        %v2514 = vpop.f32.mrf.mxu0
        %v2515 = vadd.f32 %v495, %v2514
        %v2516 = vpop.f32.mrf.mxu0
        %2517 = vmatprep.mubr.bf16.mxu0 0
        %2518 = vmatmul.mubr.bf16.gmra.mxu0 %v1508
        %v2519 = vpop.f32.mrf.mxu0
        %v2520 = vadd.f32 %v495, %v2519
        %v2521 = vpop.f32.mrf.mxu0
        %v2522 = vpop.f32.mrf.mxu0
        %v2523 = vadd.f32 %v495, %v2522
        %v2524 = vpop.f32.mrf.mxu0
        %2525 = vmatprep.mubr.bf16.mxu0 0
        %2526 = vmatmul.mubr.bf16.gmra.mxu0 %v1511
        %v2527 = vpop.f32.mrf.mxu0
        %v2528 = vadd.f32 %v495, %v2527
        %v2529 = vpop.f32.mrf.mxu0
        %v2530 = vpop.f32.mrf.mxu0
        %v2531 = vadd.f32 %v495, %v2530
        %v2532 = vpop.f32.mrf.mxu0
        %2533 = vmatprep.mubr.bf16.mxu0 0
        %2534 = vmatmul.mubr.bf16.gmra.mxu0 %v1514
        %v2535 = vpop.f32.mrf.mxu0
        %v2536 = vadd.f32 %v495, %v2535
        %v2537 = vpop.f32.mrf.mxu0
        %v2538 = vpop.f32.mrf.mxu0
        %v2539 = vadd.f32 %v495, %v2538
        %v2540 = vpop.f32.mrf.mxu0
        %2541 = vmatprep.mubr.bf16.mxu0 0
        %2542 = vmatmul.mubr.bf16.gmra.mxu0 %v1517
        %v2543 = vpop.f32.mrf.mxu0
        %v2544 = vadd.f32 %v495, %v2543
        %v2545 = vpop.f32.mrf.mxu0
        %v2546 = vpop.f32.mrf.mxu0
        %v2547 = vadd.f32 %v495, %v2546
        %v2548 = vpop.f32.mrf.mxu0
        %2549 = vmatprep.mubr.bf16.mxu0 0
        %2550 = vmatmul.mubr.bf16.gmra.mxu0 %v1520
        %v2551 = vpop.f32.mrf.mxu0
        %v2552 = vadd.f32 %v495, %v2551
        %v2553 = vpop.f32.mrf.mxu0
        %v2554 = vpop.f32.mrf.mxu0
        %v2555 = vadd.f32 %v495, %v2554
        %v2556 = vpop.f32.mrf.mxu0
        %2557 = vmatprep.mubr.bf16.mxu0 0
        %2558 = vmatmul.mubr.bf16.gmra.mxu0 %v1523
        %v2559 = vpop.f32.mrf.mxu0
        %v2560 = vadd.f32 %v495, %v2559
        %v2561 = vpop.f32.mrf.mxu0
        %v2562 = vpop.f32.mrf.mxu0
        %v2563 = vadd.f32 %v495, %v2562
        %v2564 = vpop.f32.mrf.mxu0
        %2565 = vmatprep.mubr.bf16.mxu0 0
        %2566 = vmatmul.mubr.bf16.gmra.mxu0 %v1526
        %v2567 = vpop.f32.mrf.mxu0
        %v2568 = vadd.f32 %v495, %v2567
        %v2569 = vpop.f32.mrf.mxu0
        %v2570 = vpop.f32.mrf.mxu0
        %v2571 = vadd.f32 %v495, %v2570
        %v2572 = vpop.f32.mrf.mxu0
        %2573 = vmatprep.mubr.bf16.mxu0 0
        %2574 = vmatmul.mubr.bf16.gmra.mxu0 %v1529
        %v2575 = vpop.f32.mrf.mxu0
        %v2576 = vadd.f32 %v495, %v2575
        %v2577 = vpop.f32.mrf.mxu0
        %v2578 = vpop.f32.mrf.mxu0
        %v2579 = vadd.f32 %v495, %v2578
        %v2580 = vpop.f32.mrf.mxu0
        %2581 = vmatprep.mubr.bf16.mxu0 0
        %2582 = vmatmul.mubr.bf16.gmra.mxu0 %v1532
        %v2583 = vpop.f32.mrf.mxu0
        %v2584 = vadd.f32 %v495, %v2583
        %v2585 = vpop.f32.mrf.mxu0
        %v2586 = vpop.f32.mrf.mxu0
        %v2587 = vadd.f32 %v495, %v2586
        %v2588 = vpop.f32.mrf.mxu0
        %2589 = vmatprep.mubr.bf16.mxu0 0
        %2590 = vmatmul.mubr.bf16.gmra.mxu0 %v1535
        %v2591 = vpop.f32.mrf.mxu0
        %v2592 = vadd.f32 %v495, %v2591
        %v2593 = vpop.f32.mrf.mxu0
        %v2594 = vpop.f32.mrf.mxu0
        %v2595 = vadd.f32 %v495, %v2594
        %v2596 = vpop.f32.mrf.mxu0
        %2597 = vdwg.mxu0
        %v2598 = vmax.f32 %v1576, 0.0
        %v2599 = vmax.f32 %v1579, 0.0
        %v2600 = vmax.f32 %v1584, 0.0
        %v2601 = vmax.f32 %v1587, 0.0
        %v2602 = vmax.f32 %v1592, 0.0
        %v2603 = vmax.f32 %v1595, 0.0
        %v2604 = vmax.f32 %v1600, 0.0
        %v2605 = vmax.f32 %v1603, 0.0
        %v2606 = vmax.f32 %v1608, 0.0
        %v2607 = vmax.f32 %v1611, 0.0
        %v2608 = vmax.f32 %v1616, 0.0
        %v2609 = vmax.f32 %v1619, 0.0
        %v2610 = vmax.f32 %v1624, 0.0
        %v2611 = vmax.f32 %v1627, 0.0
        %v2612 = vmax.f32 %v1632, 0.0
        %v2613 = vmax.f32 %v1635, 0.0
        %v2614 = vmax.f32 %v1640, 0.0
        %v2615 = vmax.f32 %v1643, 0.0
        %v2616 = vmax.f32 %v1648, 0.0
        %v2617 = vmax.f32 %v1651, 0.0
        %v2618 = vmax.f32 %v1656, 0.0
        %v2619 = vmax.f32 %v1659, 0.0
        %v2620 = vmax.f32 %v1664, 0.0
        %v2621 = vmax.f32 %v1667, 0.0
        %v2622 = vmax.f32 %v1672, 0.0
        %v2623 = vmax.f32 %v1675, 0.0
        %v2624 = vmax.f32 %v1680, 0.0
        %v2625 = vmax.f32 %v1683, 0.0
        %v2626 = vmax.f32 %v1688, 0.0
        %v2627 = vmax.f32 %v1691, 0.0
        %v2628 = vmax.f32 %v1696, 0.0
        %v2629 = vmax.f32 %v1699, 0.0
        %v2630 = vmax.f32 %v1704, 0.0
        %v2631 = vmax.f32 %v1707, 0.0
        %v2632 = vmax.f32 %v1712, 0.0
        %v2633 = vmax.f32 %v1715, 0.0
        %v2634 = vmax.f32 %v1720, 0.0
        %v2635 = vmax.f32 %v1723, 0.0
        %v2636 = vmax.f32 %v1728, 0.0
        %v2637 = vmax.f32 %v1731, 0.0
        %v2638 = vmax.f32 %v1736, 0.0
        %v2639 = vmax.f32 %v1739, 0.0
        %v2640 = vmax.f32 %v1744, 0.0
        %v2641 = vmax.f32 %v1747, 0.0
        %v2642 = vmax.f32 %v1752, 0.0
        %v2643 = vmax.f32 %v1755, 0.0
        %v2644 = vmax.f32 %v1760, 0.0
        %v2645 = vmax.f32 %v1763, 0.0
        %v2646 = vmax.f32 %v1768, 0.0
        %v2647 = vmax.f32 %v1771, 0.0
        %v2648 = vmax.f32 %v1776, 0.0
        %v2649 = vmax.f32 %v1779, 0.0
        %v2650 = vmax.f32 %v1784, 0.0
        %v2651 = vmax.f32 %v1787, 0.0
        %v2652 = vmax.f32 %v1792, 0.0
        %v2653 = vmax.f32 %v1795, 0.0
        %v2654 = vmax.f32 %v1800, 0.0
        %v2655 = vmax.f32 %v1803, 0.0
        %v2656 = vmax.f32 %v1808, 0.0
        %v2657 = vmax.f32 %v1811, 0.0
        %v2658 = vmax.f32 %v1816, 0.0
        %v2659 = vmax.f32 %v1819, 0.0
        %v2660 = vmax.f32 %v1824, 0.0
        %v2661 = vmax.f32 %v1827, 0.0
        %v2662 = vmax.f32 %v1832, 0.0
        %v2663 = vmax.f32 %v1835, 0.0
        %v2664 = vmax.f32 %v1840, 0.0
        %v2665 = vmax.f32 %v1843, 0.0
        %v2666 = vmax.f32 %v1848, 0.0
        %v2667 = vmax.f32 %v1851, 0.0
        %v2668 = vmax.f32 %v1856, 0.0
        %v2669 = vmax.f32 %v1859, 0.0
        %v2670 = vmax.f32 %v1864, 0.0
        %v2671 = vmax.f32 %v1867, 0.0
        %v2672 = vmax.f32 %v1872, 0.0
        %v2673 = vmax.f32 %v1875, 0.0
        %v2674 = vmax.f32 %v1880, 0.0
        %v2675 = vmax.f32 %v1883, 0.0
        %v2676 = vmax.f32 %v1888, 0.0
        %v2677 = vmax.f32 %v1891, 0.0
        %v2678 = vmax.f32 %v1896, 0.0
        %v2679 = vmax.f32 %v1899, 0.0
        %v2680 = vmax.f32 %v1904, 0.0
        %v2681 = vmax.f32 %v1907, 0.0
        %v2682 = vmax.f32 %v1912, 0.0
        %v2683 = vmax.f32 %v1915, 0.0
        %v2684 = vmax.f32 %v1920, 0.0
        %v2685 = vmax.f32 %v1923, 0.0
        %v2686 = vmax.f32 %v1928, 0.0
        %v2687 = vmax.f32 %v1931, 0.0
        %v2688 = vmax.f32 %v1936, 0.0
        %v2689 = vmax.f32 %v1939, 0.0
        %v2690 = vmax.f32 %v1944, 0.0
        %v2691 = vmax.f32 %v1947, 0.0
        %v2692 = vmax.f32 %v1952, 0.0
        %v2693 = vmax.f32 %v1955, 0.0
        %v2694 = vmax.f32 %v1960, 0.0
        %v2695 = vmax.f32 %v1963, 0.0
        %v2696 = vmax.f32 %v1968, 0.0
        %v2697 = vmax.f32 %v1971, 0.0
        %v2698 = vmax.f32 %v1976, 0.0
        %v2699 = vmax.f32 %v1979, 0.0
        %v2700 = vmax.f32 %v1984, 0.0
        %v2701 = vmax.f32 %v1987, 0.0
        %v2702 = vmax.f32 %v1992, 0.0
        %v2703 = vmax.f32 %v1995, 0.0
        %v2704 = vmax.f32 %v2000, 0.0
        %v2705 = vmax.f32 %v2003, 0.0
        %v2706 = vmax.f32 %v2008, 0.0
        %v2707 = vmax.f32 %v2011, 0.0
        %v2708 = vmax.f32 %v2016, 0.0
        %v2709 = vmax.f32 %v2019, 0.0
        %v2710 = vmax.f32 %v2024, 0.0
        %v2711 = vmax.f32 %v2027, 0.0
        %v2712 = vmax.f32 %v2032, 0.0
        %v2713 = vmax.f32 %v2035, 0.0
        %v2714 = vmax.f32 %v2040, 0.0
        %v2715 = vmax.f32 %v2043, 0.0
        %v2716 = vmax.f32 %v2048, 0.0
        %v2717 = vmax.f32 %v2051, 0.0
        %v2718 = vmax.f32 %v2056, 0.0
        %v2719 = vmax.f32 %v2059, 0.0
        %v2720 = vmax.f32 %v2064, 0.0
        %v2721 = vmax.f32 %v2067, 0.0
        %v2722 = vmax.f32 %v2072, 0.0
        %v2723 = vmax.f32 %v2075, 0.0
        %v2724 = vmax.f32 %v2080, 0.0
        %v2725 = vmax.f32 %v2083, 0.0
        %v2726 = vmax.f32 %v2088, 0.0
        %v2727 = vmax.f32 %v2091, 0.0
        %v2728 = vmax.f32 %v2096, 0.0
        %v2729 = vmax.f32 %v2099, 0.0
        %v2730 = vmax.f32 %v2104, 0.0
        %v2731 = vmax.f32 %v2107, 0.0
        %v2732 = vmax.f32 %v2112, 0.0
        %v2733 = vmax.f32 %v2115, 0.0
        %v2734 = vmax.f32 %v2120, 0.0
        %v2735 = vmax.f32 %v2123, 0.0
        %v2736 = vmax.f32 %v2128, 0.0
        %v2737 = vmax.f32 %v2131, 0.0
        %v2738 = vmax.f32 %v2136, 0.0
        %v2739 = vmax.f32 %v2139, 0.0
        %v2740 = vmax.f32 %v2144, 0.0
        %v2741 = vmax.f32 %v2147, 0.0
        %v2742 = vmax.f32 %v2152, 0.0
        %v2743 = vmax.f32 %v2155, 0.0
        %v2744 = vmax.f32 %v2160, 0.0
        %v2745 = vmax.f32 %v2163, 0.0
        %v2746 = vmax.f32 %v2168, 0.0
        %v2747 = vmax.f32 %v2171, 0.0
        %v2748 = vmax.f32 %v2176, 0.0
        %v2749 = vmax.f32 %v2179, 0.0
        %v2750 = vmax.f32 %v2184, 0.0
        %v2751 = vmax.f32 %v2187, 0.0
        %v2752 = vmax.f32 %v2192, 0.0
        %v2753 = vmax.f32 %v2195, 0.0
        %v2754 = vmax.f32 %v2200, 0.0
        %v2755 = vmax.f32 %v2203, 0.0
        %v2756 = vmax.f32 %v2208, 0.0
        %v2757 = vmax.f32 %v2211, 0.0
        %v2758 = vmax.f32 %v2216, 0.0
        %v2759 = vmax.f32 %v2219, 0.0
        %v2760 = vmax.f32 %v2224, 0.0
        %v2761 = vmax.f32 %v2227, 0.0
        %v2762 = vmax.f32 %v2232, 0.0
        %v2763 = vmax.f32 %v2235, 0.0
        %v2764 = vmax.f32 %v2240, 0.0
        %v2765 = vmax.f32 %v2243, 0.0
        %v2766 = vmax.f32 %v2248, 0.0
        %v2767 = vmax.f32 %v2251, 0.0
        %v2768 = vmax.f32 %v2256, 0.0
        %v2769 = vmax.f32 %v2259, 0.0
        %v2770 = vmax.f32 %v2264, 0.0
        %v2771 = vmax.f32 %v2267, 0.0
        %v2772 = vmax.f32 %v2272, 0.0
        %v2773 = vmax.f32 %v2275, 0.0
        %v2774 = vmax.f32 %v2280, 0.0
        %v2775 = vmax.f32 %v2283, 0.0
        %v2776 = vmax.f32 %v2288, 0.0
        %v2777 = vmax.f32 %v2291, 0.0
        %v2778 = vmax.f32 %v2296, 0.0
        %v2779 = vmax.f32 %v2299, 0.0
        %v2780 = vmax.f32 %v2304, 0.0
        %v2781 = vmax.f32 %v2307, 0.0
        %v2782 = vmax.f32 %v2312, 0.0
        %v2783 = vmax.f32 %v2315, 0.0
        %v2784 = vmax.f32 %v2320, 0.0
        %v2785 = vmax.f32 %v2323, 0.0
        %v2786 = vmax.f32 %v2328, 0.0
        %v2787 = vmax.f32 %v2331, 0.0
        %v2788 = vmax.f32 %v2336, 0.0
        %v2789 = vmax.f32 %v2339, 0.0
        %v2790 = vmax.f32 %v2344, 0.0
        %v2791 = vmax.f32 %v2347, 0.0
        %v2792 = vmax.f32 %v2352, 0.0
        %v2793 = vmax.f32 %v2355, 0.0
        %v2794 = vmax.f32 %v2360, 0.0
        %v2795 = vmax.f32 %v2363, 0.0
        %v2796 = vmax.f32 %v2368, 0.0
        %v2797 = vmax.f32 %v2371, 0.0
        %v2798 = vmax.f32 %v2376, 0.0
        %v2799 = vmax.f32 %v2379, 0.0
        %v2800 = vmax.f32 %v2384, 0.0
        %v2801 = vmax.f32 %v2387, 0.0
        %v2802 = vmax.f32 %v2392, 0.0
        %v2803 = vmax.f32 %v2395, 0.0
        %v2804 = vmax.f32 %v2400, 0.0
        %v2805 = vmax.f32 %v2403, 0.0
        %v2806 = vmax.f32 %v2408, 0.0
        %v2807 = vmax.f32 %v2411, 0.0
        %v2808 = vmax.f32 %v2416, 0.0
        %v2809 = vmax.f32 %v2419, 0.0
        %v2810 = vmax.f32 %v2424, 0.0
        %v2811 = vmax.f32 %v2427, 0.0
        %v2812 = vmax.f32 %v2432, 0.0
        %v2813 = vmax.f32 %v2435, 0.0
        %v2814 = vmax.f32 %v2440, 0.0
        %v2815 = vmax.f32 %v2443, 0.0
        %v2816 = vmax.f32 %v2448, 0.0
        %v2817 = vmax.f32 %v2451, 0.0
        %v2818 = vmax.f32 %v2456, 0.0
        %v2819 = vmax.f32 %v2459, 0.0
        %v2820 = vmax.f32 %v2464, 0.0
        %v2821 = vmax.f32 %v2467, 0.0
        %v2822 = vmax.f32 %v2472, 0.0
        %v2823 = vmax.f32 %v2475, 0.0
        %v2824 = vmax.f32 %v2480, 0.0
        %v2825 = vmax.f32 %v2483, 0.0
        %v2826 = vmax.f32 %v2488, 0.0
        %v2827 = vmax.f32 %v2491, 0.0
        %v2828 = vmax.f32 %v2496, 0.0
        %v2829 = vmax.f32 %v2499, 0.0
        %v2830 = vmax.f32 %v2504, 0.0
        %v2831 = vmax.f32 %v2507, 0.0
        %v2832 = vmax.f32 %v2512, 0.0
        %v2833 = vmax.f32 %v2515, 0.0
        %v2834 = vmax.f32 %v2520, 0.0
        %v2835 = vmax.f32 %v2523, 0.0
        %v2836 = vmax.f32 %v2528, 0.0
        %v2837 = vmax.f32 %v2531, 0.0
        %v2838 = vmax.f32 %v2536, 0.0
        %v2839 = vmax.f32 %v2539, 0.0
        %v2840 = vmax.f32 %v2544, 0.0
        %v2841 = vmax.f32 %v2547, 0.0
        %v2842 = vmax.f32 %v2552, 0.0
        %v2843 = vmax.f32 %v2555, 0.0
        %v2844 = vmax.f32 %v2560, 0.0
        %v2845 = vmax.f32 %v2563, 0.0
        %v2846 = vmax.f32 %v2568, 0.0
        %v2847 = vmax.f32 %v2571, 0.0
        %v2848 = vmax.f32 %v2576, 0.0
        %v2849 = vmax.f32 %v2579, 0.0
        %v2850 = vmax.f32 %v2584, 0.0
        %v2851 = vmax.f32 %v2587, 0.0
        %v2852 = vmax.f32 %v2592, 0.0
        %v2853 = vmax.f32 %v2595, 0.0
        %v2854 = vadd.f32 %v2598, %v2599
        %v2855 = vadd.f32 %v2854, %v2600
        %v2856 = vadd.f32 %v2855, %v2601
        %v2857 = vadd.f32 %v2856, %v2602
        %v2858 = vadd.f32 %v2857, %v2603
        %v2859 = vadd.f32 %v2858, %v2604
        %v2860 = vadd.f32 %v2859, %v2605
        %v2861 = vadd.f32 %v2860, %v2606
        %v2862 = vadd.f32 %v2861, %v2607
        %v2863 = vadd.f32 %v2862, %v2608
        %v2864 = vadd.f32 %v2863, %v2609
        %v2865 = vadd.f32 %v2864, %v2610
        %v2866 = vadd.f32 %v2865, %v2611
        %v2867 = vadd.f32 %v2866, %v2612
        %v2868 = vadd.f32 %v2867, %v2613
        %v2869 = vadd.f32 %v2868, %v2614
        %v2870 = vadd.f32 %v2869, %v2615
        %v2871 = vadd.f32 %v2870, %v2616
        %v2872 = vadd.f32 %v2871, %v2617
        %v2873 = vadd.f32 %v2872, %v2618
        %v2874 = vadd.f32 %v2873, %v2619
        %v2875 = vadd.f32 %v2874, %v2620
        %v2876 = vadd.f32 %v2875, %v2621
        %v2877 = vadd.f32 %v2876, %v2622
        %v2878 = vadd.f32 %v2877, %v2623
        %v2879 = vadd.f32 %v2878, %v2624
        %v2880 = vadd.f32 %v2879, %v2625
        %v2881 = vadd.f32 %v2880, %v2626
        %v2882 = vadd.f32 %v2881, %v2627
        %v2883 = vadd.f32 %v2882, %v2628
        %v2884 = vadd.f32 %v2883, %v2629
        %v2885 = vrot.slane %v2884, 4
        %v2886 = vadd.f32 %v2884, %v2885
        %v2887 = vrot.slane %v2886, 2
        %v2888 = vadd.f32 %v2886, %v2887
        %v2889 = vrot.slane %v2888, 1
        %v2890 = vadd.f32 %v2888, %v2889
        %v2891 = vadd.f32 %v2630, %v2631
        %v2892 = vadd.f32 %v2891, %v2632
        %v2893 = vadd.f32 %v2892, %v2633
        %v2894 = vadd.f32 %v2893, %v2634
        %v2895 = vadd.f32 %v2894, %v2635
        %v2896 = vadd.f32 %v2895, %v2636
        %v2897 = vadd.f32 %v2896, %v2637
        %v2898 = vadd.f32 %v2897, %v2638
        %v2899 = vadd.f32 %v2898, %v2639
        %v2900 = vadd.f32 %v2899, %v2640
        %v2901 = vadd.f32 %v2900, %v2641
        %v2902 = vadd.f32 %v2901, %v2642
        %v2903 = vadd.f32 %v2902, %v2643
        %v2904 = vadd.f32 %v2903, %v2644
        %v2905 = vadd.f32 %v2904, %v2645
        %v2906 = vadd.f32 %v2905, %v2646
        %v2907 = vadd.f32 %v2906, %v2647
        %v2908 = vadd.f32 %v2907, %v2648
        %v2909 = vadd.f32 %v2908, %v2649
        %v2910 = vadd.f32 %v2909, %v2650
        %v2911 = vadd.f32 %v2910, %v2651
        %v2912 = vadd.f32 %v2911, %v2652
        %v2913 = vadd.f32 %v2912, %v2653
        %v2914 = vadd.f32 %v2913, %v2654
        %v2915 = vadd.f32 %v2914, %v2655
        %v2916 = vadd.f32 %v2915, %v2656
        %v2917 = vadd.f32 %v2916, %v2657
        %v2918 = vadd.f32 %v2917, %v2658
        %v2919 = vadd.f32 %v2918, %v2659
        %v2920 = vadd.f32 %v2919, %v2660
        %v2921 = vadd.f32 %v2920, %v2661
        %v2922 = vrot.slane %v2921, 4
        %v2923 = vadd.f32 %v2921, %v2922
        %v2924 = vrot.slane %v2923, 2
        %v2925 = vadd.f32 %v2923, %v2924
        %v2926 = vrot.slane %v2925, 1
        %v2927 = vadd.f32 %v2925, %v2926
        %v2928 = vadd.f32 %v2662, %v2663
        %v2929 = vadd.f32 %v2928, %v2664
        %v2930 = vadd.f32 %v2929, %v2665
        %v2931 = vadd.f32 %v2930, %v2666
        %v2932 = vadd.f32 %v2931, %v2667
        %v2933 = vadd.f32 %v2932, %v2668
        %v2934 = vadd.f32 %v2933, %v2669
        %v2935 = vadd.f32 %v2934, %v2670
        %v2936 = vadd.f32 %v2935, %v2671
        %v2937 = vadd.f32 %v2936, %v2672
        %v2938 = vadd.f32 %v2937, %v2673
        %v2939 = vadd.f32 %v2938, %v2674
        %v2940 = vadd.f32 %v2939, %v2675
        %v2941 = vadd.f32 %v2940, %v2676
        %v2942 = vadd.f32 %v2941, %v2677
        %v2943 = vadd.f32 %v2942, %v2678
        %v2944 = vadd.f32 %v2943, %v2679
        %v2945 = vadd.f32 %v2944, %v2680
        %v2946 = vadd.f32 %v2945, %v2681
        %v2947 = vadd.f32 %v2946, %v2682
        %v2948 = vadd.f32 %v2947, %v2683
        %v2949 = vadd.f32 %v2948, %v2684
        %v2950 = vadd.f32 %v2949, %v2685
        %v2951 = vadd.f32 %v2950, %v2686
        %v2952 = vadd.f32 %v2951, %v2687
        %v2953 = vadd.f32 %v2952, %v2688
        %v2954 = vadd.f32 %v2953, %v2689
        %v2955 = vadd.f32 %v2954, %v2690
        %v2956 = vadd.f32 %v2955, %v2691
        %v2957 = vadd.f32 %v2956, %v2692
        %v2958 = vadd.f32 %v2957, %v2693
        %v2959 = vrot.slane %v2958, 4
        %v2960 = vadd.f32 %v2958, %v2959
        %v2961 = vrot.slane %v2960, 2
        %v2962 = vadd.f32 %v2960, %v2961
        %v2963 = vrot.slane %v2962, 1
        %v2964 = vadd.f32 %v2962, %v2963
        %v2965 = vadd.f32 %v2694, %v2695
        %v2966 = vadd.f32 %v2965, %v2696
        %v2967 = vadd.f32 %v2966, %v2697
        %v2968 = vadd.f32 %v2967, %v2698
        %v2969 = vadd.f32 %v2968, %v2699
        %v2970 = vadd.f32 %v2969, %v2700
        %v2971 = vadd.f32 %v2970, %v2701
        %v2972 = vadd.f32 %v2971, %v2702
        %v2973 = vadd.f32 %v2972, %v2703
        %v2974 = vadd.f32 %v2973, %v2704
        %v2975 = vadd.f32 %v2974, %v2705
        %v2976 = vadd.f32 %v2975, %v2706
        %v2977 = vadd.f32 %v2976, %v2707
        %v2978 = vadd.f32 %v2977, %v2708
        %v2979 = vadd.f32 %v2978, %v2709
        %v2980 = vadd.f32 %v2979, %v2710
        %v2981 = vadd.f32 %v2980, %v2711
        %v2982 = vadd.f32 %v2981, %v2712
        %v2983 = vadd.f32 %v2982, %v2713
        %v2984 = vadd.f32 %v2983, %v2714
        %v2985 = vadd.f32 %v2984, %v2715
        %v2986 = vadd.f32 %v2985, %v2716
        %v2987 = vadd.f32 %v2986, %v2717
        %v2988 = vadd.f32 %v2987, %v2718
        %v2989 = vadd.f32 %v2988, %v2719
        %v2990 = vadd.f32 %v2989, %v2720
        %v2991 = vadd.f32 %v2990, %v2721
        %v2992 = vadd.f32 %v2991, %v2722
        %v2993 = vadd.f32 %v2992, %v2723
        %v2994 = vadd.f32 %v2993, %v2724
        %v2995 = vadd.f32 %v2994, %v2725
        %v2996 = vrot.slane %v2995, 4
        %v2997 = vadd.f32 %v2995, %v2996
        %v2998 = vrot.slane %v2997, 2
        %v2999 = vadd.f32 %v2997, %v2998
        %v3000 = vrot.slane %v2999, 1
        %v3001 = vadd.f32 %v2999, %v3000
        %v3002 = vadd.f32 %v2726, %v2727
        %v3003 = vadd.f32 %v3002, %v2728
        %v3004 = vadd.f32 %v3003, %v2729
        %v3005 = vadd.f32 %v3004, %v2730
        %v3006 = vadd.f32 %v3005, %v2731
        %v3007 = vadd.f32 %v3006, %v2732
        %v3008 = vadd.f32 %v3007, %v2733
        %v3009 = vadd.f32 %v3008, %v2734
        %v3010 = vadd.f32 %v3009, %v2735
        %v3011 = vadd.f32 %v3010, %v2736
        %v3012 = vadd.f32 %v3011, %v2737
        %v3013 = vadd.f32 %v3012, %v2738
        %v3014 = vadd.f32 %v3013, %v2739
        %v3015 = vadd.f32 %v3014, %v2740
        %v3016 = vadd.f32 %v3015, %v2741
        %v3017 = vadd.f32 %v3016, %v2742
        %v3018 = vadd.f32 %v3017, %v2743
        %v3019 = vadd.f32 %v3018, %v2744
        %v3020 = vadd.f32 %v3019, %v2745
        %v3021 = vadd.f32 %v3020, %v2746
        %v3022 = vadd.f32 %v3021, %v2747
        %v3023 = vadd.f32 %v3022, %v2748
        %v3024 = vadd.f32 %v3023, %v2749
        %v3025 = vadd.f32 %v3024, %v2750
        %v3026 = vadd.f32 %v3025, %v2751
        %v3027 = vadd.f32 %v3026, %v2752
        %v3028 = vadd.f32 %v3027, %v2753
        %v3029 = vadd.f32 %v3028, %v2754
        %v3030 = vadd.f32 %v3029, %v2755
        %v3031 = vadd.f32 %v3030, %v2756
        %v3032 = vadd.f32 %v3031, %v2757
        %v3033 = vrot.slane %v3032, 4
        %v3034 = vadd.f32 %v3032, %v3033
        %v3035 = vrot.slane %v3034, 2
        %v3036 = vadd.f32 %v3034, %v3035
        %v3037 = vrot.slane %v3036, 1
        %v3038 = vadd.f32 %v3036, %v3037
        %v3039 = vadd.f32 %v2758, %v2759
        %v3040 = vadd.f32 %v3039, %v2760
        %v3041 = vadd.f32 %v3040, %v2761
        %v3042 = vadd.f32 %v3041, %v2762
        %v3043 = vadd.f32 %v3042, %v2763
        %v3044 = vadd.f32 %v3043, %v2764
        %v3045 = vadd.f32 %v3044, %v2765
        %v3046 = vadd.f32 %v3045, %v2766
        %v3047 = vadd.f32 %v3046, %v2767
        %v3048 = vadd.f32 %v3047, %v2768
        %v3049 = vadd.f32 %v3048, %v2769
        %v3050 = vadd.f32 %v3049, %v2770
        %v3051 = vadd.f32 %v3050, %v2771
        %v3052 = vadd.f32 %v3051, %v2772
        %v3053 = vadd.f32 %v3052, %v2773
        %v3054 = vadd.f32 %v3053, %v2774
        %v3055 = vadd.f32 %v3054, %v2775
        %v3056 = vadd.f32 %v3055, %v2776
        %v3057 = vadd.f32 %v3056, %v2777
        %v3058 = vadd.f32 %v3057, %v2778
        %v3059 = vadd.f32 %v3058, %v2779
        %v3060 = vadd.f32 %v3059, %v2780
        %v3061 = vadd.f32 %v3060, %v2781
        %v3062 = vadd.f32 %v3061, %v2782
        %v3063 = vadd.f32 %v3062, %v2783
        %v3064 = vadd.f32 %v3063, %v2784
        %v3065 = vadd.f32 %v3064, %v2785
        %v3066 = vadd.f32 %v3065, %v2786
        %v3067 = vadd.f32 %v3066, %v2787
        %v3068 = vadd.f32 %v3067, %v2788
        %v3069 = vadd.f32 %v3068, %v2789
        %v3070 = vrot.slane %v3069, 4
        %v3071 = vadd.f32 %v3069, %v3070
        %v3072 = vrot.slane %v3071, 2
        %v3073 = vadd.f32 %v3071, %v3072
        %v3074 = vrot.slane %v3073, 1
        %v3075 = vadd.f32 %v3073, %v3074
        %v3076 = vadd.f32 %v2790, %v2791
        %v3077 = vadd.f32 %v3076, %v2792
        %v3078 = vadd.f32 %v3077, %v2793
        %v3079 = vadd.f32 %v3078, %v2794
        %v3080 = vadd.f32 %v3079, %v2795
        %v3081 = vadd.f32 %v3080, %v2796
        %v3082 = vadd.f32 %v3081, %v2797
        %v3083 = vadd.f32 %v3082, %v2798
        %v3084 = vadd.f32 %v3083, %v2799
        %v3085 = vadd.f32 %v3084, %v2800
        %v3086 = vadd.f32 %v3085, %v2801
        %v3087 = vadd.f32 %v3086, %v2802
        %v3088 = vadd.f32 %v3087, %v2803
        %v3089 = vadd.f32 %v3088, %v2804
        %v3090 = vadd.f32 %v3089, %v2805
        %v3091 = vadd.f32 %v3090, %v2806
        %v3092 = vadd.f32 %v3091, %v2807
        %v3093 = vadd.f32 %v3092, %v2808
        %v3094 = vadd.f32 %v3093, %v2809
        %v3095 = vadd.f32 %v3094, %v2810
        %v3096 = vadd.f32 %v3095, %v2811
        %v3097 = vadd.f32 %v3096, %v2812
        %v3098 = vadd.f32 %v3097, %v2813
        %v3099 = vadd.f32 %v3098, %v2814
        %v3100 = vadd.f32 %v3099, %v2815
        %v3101 = vadd.f32 %v3100, %v2816
        %v3102 = vadd.f32 %v3101, %v2817
        %v3103 = vadd.f32 %v3102, %v2818
        %v3104 = vadd.f32 %v3103, %v2819
        %v3105 = vadd.f32 %v3104, %v2820
        %v3106 = vadd.f32 %v3105, %v2821
        %v3107 = vrot.slane %v3106, 4
        %v3108 = vadd.f32 %v3106, %v3107
        %v3109 = vrot.slane %v3108, 2
        %v3110 = vadd.f32 %v3108, %v3109
        %v3111 = vrot.slane %v3110, 1
        %v3112 = vadd.f32 %v3110, %v3111
        %v3113 = vadd.f32 %v2822, %v2823
        %v3114 = vadd.f32 %v3113, %v2824
        %v3115 = vadd.f32 %v3114, %v2825
        %v3116 = vadd.f32 %v3115, %v2826
        %v3117 = vadd.f32 %v3116, %v2827
        %v3118 = vadd.f32 %v3117, %v2828
        %v3119 = vadd.f32 %v3118, %v2829
        %v3120 = vadd.f32 %v3119, %v2830
        %v3121 = vadd.f32 %v3120, %v2831
        %v3122 = vadd.f32 %v3121, %v2832
        %v3123 = vadd.f32 %v3122, %v2833
        %v3124 = vadd.f32 %v3123, %v2834
        %v3125 = vadd.f32 %v3124, %v2835
        %v3126 = vadd.f32 %v3125, %v2836
        %v3127 = vadd.f32 %v3126, %v2837
        %v3128 = vadd.f32 %v3127, %v2838
        %v3129 = vadd.f32 %v3128, %v2839
        %v3130 = vadd.f32 %v3129, %v2840
        %v3131 = vadd.f32 %v3130, %v2841
        %v3132 = vadd.f32 %v3131, %v2842
        %v3133 = vadd.f32 %v3132, %v2843
        %v3134 = vadd.f32 %v3133, %v2844
        %v3135 = vadd.f32 %v3134, %v2845
        %v3136 = vadd.f32 %v3135, %v2846
        %v3137 = vadd.f32 %v3136, %v2847
        %v3138 = vadd.f32 %v3137, %v2848
        %v3139 = vadd.f32 %v3138, %v2849
        %v3140 = vadd.f32 %v3139, %v2850
        %v3141 = vadd.f32 %v3140, %v2851
        %v3142 = vadd.f32 %v3141, %v2852
        %v3143 = vadd.f32 %v3142, %v2853
        %v3144 = vrot.slane %v3143, 4
        %v3145 = vadd.f32 %v3143, %v3144
        %v3146 = vrot.slane %v3145, 2
        %v3147 = vadd.f32 %v3145, %v3146
        %v3148 = vrot.slane %v3147, 1
        %v3149 = vadd.f32 %v3147, %v3148
        %v3150 = vrcp.pop 256.0
        %v3151 = vmul.f32 %v2890, %v3150
        %v3152 = vmul.f32 %v2927, %v3150
        %v3153 = vmul.f32 %v2964, %v3150
        %v3154 = vmul.f32 %v3001, %v3150
        %v3155 = vmul.f32 %v3038, %v3150
        %v3156 = vmul.f32 %v3075, %v3150
        %v3157 = vmul.f32 %v3112, %v3150
        %v3158 = vmul.f32 %v3149, %v3150
        %v3159 = vld [vmem:[%s3] sm:$0xff]
        %v3160 = vld [vmem:[%s3 + $0x8] sm:$0xff]
        %v3161 = vld [vmem:[%s3 + $0x10] sm:$0xff]
        %v3162 = vld [vmem:[%s3 + $0x18] sm:$0xff]
        %v3163 = vld [vmem:[%s3 + $0x20] sm:$0xff]
        %v3164 = vld [vmem:[%s3 + $0x28] sm:$0xff]
        %v3165 = vld [vmem:[%s3 + $0x30] sm:$0xff]
        %v3166 = vld [vmem:[%s3 + $0x38] sm:$0xff]
        %v3167 = vld [vmem:[%s3 + $0x40] sm:$0xff]
        %v3168 = vld [vmem:[%s3 + $0x48] sm:$0xff]
        %v3169 = vld [vmem:[%s3 + $0x50] sm:$0xff]
        %v3170 = vld [vmem:[%s3 + $0x58] sm:$0xff]
        %v3171 = vld [vmem:[%s3 + $0x60] sm:$0xff]
        %v3172 = vld [vmem:[%s3 + $0x68] sm:$0xff]
        %v3173 = vld [vmem:[%s3 + $0x70] sm:$0xff]
        %v3174 = vld [vmem:[%s3 + $0x78] sm:$0xff]
        %v3175 = vld [vmem:[%s4] sm:$0x1]
        %v3177 = vlaneseq
        %v3178 = vshrl.u32 %v3177, 7
        %v3179 = vsub.s32 0, %v3178
        %v3180 = vrot.slane %v3175, %v3179
        %vm3190 = vcmask 1041409
        %v3191 = vsel %vm3190, %v3152, %v3151
        %vm3192 = vcmask 1042434
        %v3193 = vsel %vm3192, %v3153, %v3191
        %vm3194 = vcmask 1043459
        %v3195 = vsel %vm3194, %v3154, %v3193
        %vm3196 = vcmask 1044484
        %v3197 = vsel %vm3196, %v3155, %v3195
        %vm3198 = vcmask 1045509
        %v3199 = vsel %vm3198, %v3156, %v3197
        %vm3200 = vcmask 1046534
        %v3201 = vsel %vm3200, %v3157, %v3199
        %vm3202 = vcmask 1047559
        %v3203 = vsel %vm3202, %v3158, %v3201
        %3205 = vmatprep.subr.mxu0 0.0
        %3206 = vmatpush1.msra.mxu0 %v3174
        %3207 = vmatprep.subr.mxu0 0.0
        %3208 = vmatpush1.msra.mxu0 %v3173
        %3209 = vmatprep.subr.mxu0 0.0
        %3210 = vmatpush1.msra.mxu0 %v3172
        %3211 = vmatprep.subr.mxu0 0.0
        %3212 = vmatpush1.msra.mxu0 %v3171
        %3213 = vmatprep.subr.mxu0 0.0
        %3214 = vmatpush1.msra.mxu0 %v3170
        %3215 = vmatprep.subr.mxu0 0.0
        %3216 = vmatpush1.msra.mxu0 %v3169
        %3217 = vmatprep.subr.mxu0 0.0
        %3218 = vmatpush1.msra.mxu0 %v3168
        %3219 = vmatprep.subr.mxu0 0.0
        %3220 = vmatpush1.msra.mxu0 %v3167
        %3221 = vmatprep.subr.mxu0 0.0
        %3222 = vmatpush1.msra.mxu0 %v3166
        %3223 = vmatprep.subr.mxu0 0.0
        %3224 = vmatpush1.msra.mxu0 %v3165
        %3225 = vmatprep.subr.mxu0 0.0
        %3226 = vmatpush1.msra.mxu0 %v3164
        %3227 = vmatprep.subr.mxu0 0.0
        %3228 = vmatpush1.msra.mxu0 %v3163
        %3229 = vmatprep.subr.mxu0 0.0
        %3230 = vmatpush1.msra.mxu0 %v3162
        %3231 = vmatprep.subr.mxu0 0.0
        %3232 = vmatpush1.msra.mxu0 %v3161
        %3233 = vmatprep.subr.mxu0 0.0
        %3234 = vmatpush1.msra.mxu0 %v3160
        %3235 = vmatprep.subr.mxu0 0.0
        %3236 = vmatpush1.msra.mxu0 %v3159
        %3237 = vmatprep.subr.mxu0 0.0
        %3238 = vmatpush2.msra.mxu0 0.0
        %3239 = vmatprep.subr.mxu0 0.0
        %3240 = vmatpush2.msra.mxu0 0.0
        %3241 = vmatprep.subr.mxu0 0.0
        %3242 = vmatpush2.msra.mxu0 0.0
        %3243 = vmatprep.subr.mxu0 0.0
        %3244 = vmatpush2.msra.mxu0 0.0
        %3245 = vmatprep.subr.mxu0 0.0
        %3246 = vmatpush2.msra.mxu0 0.0
        %3247 = vmatprep.subr.mxu0 0.0
        %3248 = vmatpush2.msra.mxu0 0.0
        %3249 = vmatprep.subr.mxu0 0.0
        %3250 = vmatpush2.msra.mxu0 0.0
        %3251 = vmatprep.subr.mxu0 0.0
        %3252 = vmatpush2.msra.mxu0 0.0
        %3253 = vmatprep.subr.mxu0 0.0
        %3254 = vmatpush2.msra.mxu0 0.0
        %3255 = vmatprep.subr.mxu0 0.0
        %3256 = vmatpush2.msra.mxu0 0.0
        %3257 = vmatprep.subr.mxu0 0.0
        %3258 = vmatpush2.msra.mxu0 0.0
        %3259 = vmatprep.subr.mxu0 0.0
        %3260 = vmatpush2.msra.mxu0 0.0
        %3261 = vmatprep.subr.mxu0 0.0
        %3262 = vmatpush2.msra.mxu0 0.0
        %3263 = vmatprep.subr.mxu0 0.0
        %3264 = vmatpush2.msra.mxu0 0.0
        %3265 = vmatprep.subr.mxu0 0.0
        %3266 = vmatpush2.msra.mxu0 0.0
        %3267 = vmatprep.subr.mxu0 0.0
        %3268 = vmatpush2.msra.mxu0 0.0
        %3269 = vmatprep.mubr.f32.mxu0 0.0
        %3270 = vmatmul.mubr.f32.gmra.mxu0 %v3203
        %v3271 = vpop.f32.mrf.mxu0
        %v3272 = vadd.f32 %v3180, %v3271
        %v3273 = vpop.f32.mrf.mxu0
        %3274 = vdwg.mxu0
        %v3275 = vmax.f32 %v3272, 0.0
        %3276 = vst [vmem:[%s220] sm:$0xff] %v3275
        %s3277 = sand.u32 %s137, 1
        %s3278 = scalar_lea.sflag [#allocation3], %s3277
        %s3279 = sand.u32 %s137, 1
        %s3280 = smul.addr %s3279, 8
        %s3281 = scalar_lea.vmem [#allocation2], %s3280
        // Predicated region
        $region41: #{tpu_custom_call.1} parent=39 // pred_check
          %p3282 = pneg %p147
        $region42: #{tpu_custom_call.1} parent=39 // pred_check_branch
          %3284 = sbr.rel (%p3282) target = $region44
        $region43: #{tpu_custom_call.1} parent=39 // pred_region
          %s3286 = ssub.s32 128, 128
          %3287 = vsyncadd %s3278, %s3286
          %s3288 = smul.addr %s19, 128
          %s3289 = scalar_lea.hbm %s5, %s3288
          %s3291 = sshll.u32 %s3281, 4
          %s3292 = int_to_ptr.vmem [resolvable:$true] %s3291
          %3294 = dma.vmem_to_hbm [thread:$0]  %s3292, 128, %s3289, %s3278
        $region44: #{tpu_custom_call.1} parent=39 // pred_fallthru
          _
      $region40: #{tpu_custom_call.1} parent=5 // pred_fallthru
        _
      %p3295 = scmp.le.s32.totalorder 2, %s14
      // Predicated region
      $region45: #{tpu_custom_call.1} parent=5 // pred_check
        %p3296 = pneg %p3295
      $region46: #{tpu_custom_call.1} parent=5 // pred_check_branch
        %3298 = sbr.rel (%p3296) target = $region48
      $region47: #{tpu_custom_call.1} parent=5 // pred_region
        %s3299 = ssub.s32 %s14, 2
        // Predicated region
        $region49: #{tpu_custom_call.1} parent=47 // pred_check
          %p3300 = pneg %p153
        $region50: #{tpu_custom_call.1} parent=47 // pred_check_branch
          %3302 = sbr.rel (%p3300) target = $region52
        $region51: #{tpu_custom_call.1} parent=47 // pred_region
          %s3303 = sand.u32 %s138, 1
          %s3304 = scalar_lea.sflag [#allocation3], %s3303
          %s3305 = sand.u32 %s138, 1
          %s3306 = smul.addr %s3305, 8
          %s3307 = scalar_lea.vmem [#allocation2], %s3306
          %3308 = dma.done %s3304, 128
        $region52: #{tpu_custom_call.1} parent=47 // pred_fallthru
          _
      $region48: #{tpu_custom_call.1} parent=5 // pred_fallthru
        _
    $region6: #{tpu_custom_call.1} parent=1 // loop_footer
      %s18 = sadd.s32 1, %s14
    $region7: #{tpu_custom_call.1} parent=1 // loop_footer_branch
      %13 = sbr.rel target = $region3
    $region8: #{tpu_custom_call.1} parent=1 // loop_exit
      _
    %3309 = vsyncpa [#allocation3], 1
    %s3310 = scalar_lea.sflag [#allocation3], 1
    %3311 = vsyncpa %s3310, 1

</llo_original>
